<compile_context>
chip_gen: v5e
topology: v5e:2x2
jax: 0.10.0
libtpu: 0.0.40
codegen_flags: <defaults>
</compile_context>

<pallas_src>
import functools

import jax
import jax.numpy as jnp
from jax.experimental import pallas as pl
from jax.experimental.pallas import tpu as pltpu


# ----------------------------------------------------------------------------
# In-kernel helpers (traced inside the Pallas kernel body).
# ----------------------------------------------------------------------------
def _gru_step(h, x, wx_ref, wh_ref, whh_ref, b_ref):
    """One ConvGRU (1x1-conv) step in (C, M) layout. x / wx_ref may be None (zero input)."""
    ch = whh_ref.shape[0]
    b = b_ref[...]                                                        # (3Ch, 1)
    gh = jnp.dot(wh_ref[...], h, preferred_element_type=jnp.float32)     # (2Ch, M)
    if x is None:
        gz = gh[0:ch] + b[0:ch]
        gr = gh[ch:2 * ch] + b[ch:2 * ch]
        gc = b[2 * ch:3 * ch]
    else:
        gx = jnp.dot(wx_ref[...], x, preferred_element_type=jnp.float32)  # (3Ch, M)
        gz = gx[0:ch] + gh[0:ch] + b[0:ch]
        gr = gx[ch:2 * ch] + gh[ch:2 * ch] + b[ch:2 * ch]
        gc = gx[2 * ch:3 * ch] + b[2 * ch:3 * ch]
    z = jax.nn.sigmoid(gz)
    r = jax.nn.sigmoid(gr)
    ht = jnp.tanh(gc + jnp.dot(whh_ref[...], r * h,
                               preferred_element_type=jnp.float32))
    return (1.0 - z) * ht + z * h


def _subnet(h, wc_ref, bc_ref, apply_act, negative_slope):
    y = jnp.dot(wc_ref[...], h, preferred_element_type=jnp.float32) + bc_ref[...]
    if apply_act:
        y = jnp.where(y >= 0, y, negative_slope * y)
    return y


# ----------------------------------------------------------------------------
# Fused forecaster kernel: grid = (M tiles [parallel], T [arbitrary/sequential]).
# Hidden states of all three ConvGRUs live in VMEM scratch across the T axis.
# ----------------------------------------------------------------------------
def _forecaster_kernel(h3_ref, h2_ref, h1_ref,
                       wh3, whh3, b3, wc3, bc3,
                       wx2, wh2, whh2, b2, wc2, bc2,
                       wx1, wh1, whh1, b1, wc1, bc1,
                       y_ref, h3_scr, h2_scr, h1_scr, *, negative_slope):
    t = pl.program_id(1)

    @pl.when(t == 0)
    def _():
        h3_scr[...] = h3_ref[...]
        h2_scr[...] = h2_ref[...]
        h1_scr[...] = h1_ref[...]

    # block 3: rnn3 (zero input) + stage3 (1x1 conv + LeakyReLU)
    h3 = _gru_step(h3_scr[...], None, None, wh3, whh3, b3)
    h3_scr[...] = h3
    y3 = _subnet(h3, wc3, bc3, True, negative_slope)            # (C2, Mt)

    # block 2: rnn2 + stage2
    h2 = _gru_step(h2_scr[...], y3, wx2, wh2, whh2, b2)
    h2_scr[...] = h2
    y2 = _subnet(h2, wc2, bc2, True, negative_slope)            # (C1, Mt)

    # block 1: rnn1 + stage1 -> single channel, no activation
    h1 = _gru_step(h1_scr[...], y2, wx1, wh1, whh1, b1)
    h1_scr[...] = h1
    y = _subnet(h1, wc1, bc1, False, negative_slope)            # (1, Mt), lane-dense

    y_ref[0] = y.astype(y_ref.dtype)


# ----------------------------------------------------------------------------
# JAX wrapper: parameter packing, layout shuffles, pallas_call.
# ----------------------------------------------------------------------------
def _pack_block(p, has_input):
    packed = dict(
        wh=jnp.concatenate([p["whz"], p["whr"]], axis=0),            # (2Ch, Ch)
        whh=p["whh"],                                                # (Ch, Ch)
        b=jnp.concatenate([p["bz"], p["br"], p["bh"]], axis=0),      # (3Ch, 1)
        wc=p["wc"], bc=p["bc"],
    )
    if has_input:
        packed["wx"] = jnp.concatenate([p["wxz"], p["wxr"], p["wxh"]], axis=0)  # (3Ch, Cin)
    return packed


def _nchw_to_cm(h):
    B, C, H, W = h.shape
    return jnp.transpose(h, (1, 0, 2, 3)).reshape(C, B * H * W)


def forecaster_forward(hidden_states, params, target_len, *, tile_m=None,
                       negative_slope=0.2):
    """hidden_states: [h1, h2, h3] in NCHW (encoder order). Returns (T, B, H, W)."""
    B, _, H, W = hidden_states[0].shape
    M = B * H * W
    T = target_len

    h1 = _nchw_to_cm(hidden_states[0])      # (C1, M) for rnn1
    h2 = _nchw_to_cm(hidden_states[1])      # (C2, M) for rnn2
    h3 = _nchw_to_cm(hidden_states[2])      # (C3, M) for rnn3
    C1, C2, C3 = h1.shape[0], h2.shape[0], h3.shape[0]

    p3 = _pack_block(params["block3"], has_input=False)
    p2 = _pack_block(params["block2"], has_input=True)
    p1 = _pack_block(params["block1"], has_input=True)

    if tile_m is None:
        # 2+ tiles lets v7x's two TensorCores split the spatial axis; keeps VMEM bounded.
        tile_m = 256 if (M % 256 == 0) else M
    assert M % tile_m == 0
    n_m = M // tile_m

    full = lambda a: pl.BlockSpec(a.shape, lambda m, t: (0, 0))
    kernel = functools.partial(_forecaster_kernel, negative_slope=negative_slope)

    y = pl.pallas_call(
        kernel,
        out_shape=jax.ShapeDtypeStruct((T, 1, M), jnp.float32),
        grid_spec=pltpu.PrefetchScalarGridSpec(
            num_scalar_prefetch=0,
            grid=(n_m, T),
            in_specs=[
                pl.BlockSpec((C3, tile_m), lambda m, t: (0, m)),   # h3_0
                pl.BlockSpec((C2, tile_m), lambda m, t: (0, m)),   # h2_0
                pl.BlockSpec((C1, tile_m), lambda m, t: (0, m)),   # h1_0
                full(p3["wh"]), full(p3["whh"]), full(p3["b"]),
                full(p3["wc"]), full(p3["bc"]),
                full(p2["wx"]), full(p2["wh"]), full(p2["whh"]),
                full(p2["b"]), full(p2["wc"]), full(p2["bc"]),
                full(p1["wx"]), full(p1["wh"]), full(p1["whh"]),
                full(p1["b"]), full(p1["wc"]), full(p1["bc"]),
            ],
            out_specs=pl.BlockSpec((1, 1, tile_m), lambda m, t: (t, 0, m)),
            scratch_shapes=[
                pltpu.VMEM((C3, tile_m), jnp.float32),
                pltpu.VMEM((C2, tile_m), jnp.float32),
                pltpu.VMEM((C1, tile_m), jnp.float32),
            ],
        ),
        compiler_params=pltpu.CompilerParams(
            dimension_semantics=("parallel", "arbitrary")),
    )(h3, h2, h1,
      p3["wh"], p3["whh"], p3["b"], p3["wc"], p3["bc"],
      p2["wx"], p2["wh"], p2["whh"], p2["b"], p2["wc"], p2["bc"],
      p1["wx"], p1["wh"], p1["whh"], p1["b"], p1["wc"], p1["bc"])

    assert y.shape[1] == 1, "Finally, there should be only one channel"
    return y.reshape(T, B, H, W)        # == input[:, :, 0, :, :] in torch layout


# ----------------------------------------------------------------------------
# Pure-JAX reference (same math, lax.scan) for correctness check.
# ----------------------------------------------------------------------------
def _ref_stage(x, h0, p, apply_act, slope=0.2, T=None):
    """x: (T, Cin, M) or None (zero input); h0: (Ch, M)."""
    def step(h, xt):
        gz = p["whz"] @ h + p["bz"]
        gr = p["whr"] @ h + p["br"]
        gc = p["bh"]
        if xt is not None:
            gz = gz + p["wxz"] @ xt
            gr = gr + p["wxr"] @ xt
            gc = gc + p["wxh"] @ xt
        z = jax.nn.sigmoid(gz)
        r = jax.nn.sigmoid(gr)
        ht = jnp.tanh(gc + p["whh"] @ (r * h))
        hn = (1.0 - z) * ht + z * h
        return hn, hn

    if x is None:
        _, hs = jax.lax.scan(step, h0, xs=None, length=T)
    else:
        _, hs = jax.lax.scan(step, h0, x)
    y = jnp.einsum("oc,tcm->tom", p["wc"], hs) + p["bc"]
    if apply_act:
        y = jnp.where(y >= 0, y, slope * y)
    return y


def _ref_forecaster(hidden_states, params, target_len):
    B, _, H, W = hidden_states[0].shape
    h1 = _nchw_to_cm(hidden_states[0])
    h2 = _nchw_to_cm(hidden_states[1])
    h3 = _nchw_to_cm(hidden_states[2])
    y = _ref_stage(None, h3, params["block3"], True, T=target_len)
    y = _ref_stage(y, h2, params["block2"], True)
    y = _ref_stage(y, h1, params["block1"], False)      # (T, 1, M)
    return y.reshape(target_len, B, H, W)


# ----------------------------------------------------------------------------
# Deterministic parameter init (channels-first weights: (out, in)).
# ----------------------------------------------------------------------------
def _init_block(key, cin, ch, cout, scale=0.1, has_input=True):
    ks = jax.random.split(key, 11)
    n = lambda k, s: jax.random.normal(k, s, jnp.float32) * scale
    p = dict(
        whz=n(ks[1], (ch, ch)), bz=n(ks[2], (ch, 1)),
        whr=n(ks[4], (ch, ch)), br=n(ks[5], (ch, 1)),
        whh=n(ks[7], (ch, ch)), bh=n(ks[8], (ch, 1)),
        wc=n(ks[9], (cout, ch)), bc=n(ks[10], (cout, 1)),
    )
    if has_input:
        p.update(
            wxz=n(ks[0], (ch, cin)),
            wxr=n(ks[3], (ch, cin)),
            wxh=n(ks[6], (ch, cin)),
        )
    return p


if __name__ == "__main__":
    key = jax.random.PRNGKey(0)
    k_p3, k_p2, k_p1, k_h1, k_h2, k_h3 = jax.random.split(key, 6)

    B, H, W = 2, 16, 16
    TARGET_LEN = 8
    C1, C2, C3 = 8, 8, 16        # hidden channels of rnn1 / rnn2 / rnn3

    params = {
        # block3: rnn3 (zero input, hidden=16) + stage3 conv 16->8
        "block3": _init_block(k_p3, cin=C3, ch=C3, cout=C2, has_input=False),
        # block2: rnn2 (cin=8, hidden=8) + stage2 conv 8->8
        "block2": _init_block(k_p2, cin=C2, ch=C2, cout=C1, has_input=True),
        # block1: rnn1 (cin=8, hidden=8) + stage1 conv 8->1
        "block1": _init_block(k_p1, cin=C1, ch=C1, cout=1, has_input=True),
    }

    hidden_states = [
        jax.random.normal(k_h1, (B, C1, H, W), jnp.float32),   # for rnn1
        jax.random.normal(k_h2, (B, C2, H, W), jnp.float32),   # for rnn2
        jax.random.normal(k_h3, (B, C3, H, W), jnp.float32),   # for rnn3
    ]

    out = forecaster_forward(hidden_states, params, TARGET_LEN)
    out = jax.block_until_ready(out)
    assert out.shape == (TARGET_LEN, B, H, W), out.shape

    ref = jax.block_until_ready(_ref_forecaster(hidden_states, params, TARGET_LEN))
    max_err = float(jnp.max(jnp.abs(out - ref)))
    assert max_err < 1e-3, f"mismatch vs reference: {max_err}"

    print("KERNEL_OK")
</pallas_src>

<mosaic_0001>
module attributes {stable_mosaic.version = 11 : i64} {
  func.func @_forecaster_kernel(%arg0: i32, %arg1: i32, %arg2: memref<16x256xf32, #tpu.memory_space<vmem>>, %arg3: memref<8x256xf32, #tpu.memory_space<vmem>>, %arg4: memref<8x256xf32, #tpu.memory_space<vmem>>, %arg5: memref<32x16xf32, #tpu.memory_space<vmem>>, %arg6: memref<16x16xf32, #tpu.memory_space<vmem>>, %arg7: memref<48x1xf32, #tpu.memory_space<vmem>>, %arg8: memref<8x16xf32, #tpu.memory_space<vmem>>, %arg9: memref<8x1xf32, #tpu.memory_space<vmem>>, %arg10: memref<24x8xf32, #tpu.memory_space<vmem>>, %arg11: memref<16x8xf32, #tpu.memory_space<vmem>>, %arg12: memref<8x8xf32, #tpu.memory_space<vmem>>, %arg13: memref<24x1xf32, #tpu.memory_space<vmem>>, %arg14: memref<8x8xf32, #tpu.memory_space<vmem>>, %arg15: memref<8x1xf32, #tpu.memory_space<vmem>>, %arg16: memref<24x8xf32, #tpu.memory_space<vmem>>, %arg17: memref<16x8xf32, #tpu.memory_space<vmem>>, %arg18: memref<8x8xf32, #tpu.memory_space<vmem>>, %arg19: memref<24x1xf32, #tpu.memory_space<vmem>>, %arg20: memref<1x8xf32, #tpu.memory_space<vmem>>, %arg21: memref<1x1xf32, #tpu.memory_space<vmem>>, %arg22: memref<1x1x256xf32, #tpu.memory_space<vmem>>, %arg23: memref<16x256xf32, #tpu.memory_space<vmem>>, %arg24: memref<8x256xf32, #tpu.memory_space<vmem>>, %arg25: memref<8x256xf32, #tpu.memory_space<vmem>>) attributes {dimension_semantics = [#tpu.dimension_semantics<parallel>, #tpu.dimension_semantics<arbitrary>], iteration_bounds = array<i64: 2, 8>, scalar_prefetch = 0 : i64, scratch_operands = 3 : i64, tpu.core_type = #tpu.core_type<tc>, window_params = [{transform_indices = @transform_0, window_bounds = array<i64: 16, 256>}, {transform_indices = @transform_1, window_bounds = array<i64: 8, 256>}, {transform_indices = @transform_2, window_bounds = array<i64: 8, 256>}, {pipeline_mode = #tpu.pipeline_mode<synchronous>, transform_indices = @transform_3, window_bounds = array<i64: 32, 16>}, {pipeline_mode = #tpu.pipeline_mode<synchronous>, transform_indices = @transform_4, window_bounds = array<i64: 16, 16>}, {pipeline_mode = #tpu.pipeline_mode<synchronous>, transform_indices = @transform_5, window_bounds = array<i64: 48, 1>}, {pipeline_mode = #tpu.pipeline_mode<synchronous>, transform_indices = @transform_6, window_bounds = array<i64: 8, 16>}, {pipeline_mode = #tpu.pipeline_mode<synchronous>, transform_indices = @transform_7, window_bounds = array<i64: 8, 1>}, {pipeline_mode = #tpu.pipeline_mode<synchronous>, transform_indices = @transform_8, window_bounds = array<i64: 24, 8>}, {pipeline_mode = #tpu.pipeline_mode<synchronous>, transform_indices = @transform_9, window_bounds = array<i64: 16, 8>}, {pipeline_mode = #tpu.pipeline_mode<synchronous>, transform_indices = @transform_10, window_bounds = array<i64: 8, 8>}, {pipeline_mode = #tpu.pipeline_mode<synchronous>, transform_indices = @transform_11, window_bounds = array<i64: 24, 1>}, {pipeline_mode = #tpu.pipeline_mode<synchronous>, transform_indices = @transform_12, window_bounds = array<i64: 8, 8>}, {pipeline_mode = #tpu.pipeline_mode<synchronous>, transform_indices = @transform_13, window_bounds = array<i64: 8, 1>}, {pipeline_mode = #tpu.pipeline_mode<synchronous>, transform_indices = @transform_14, window_bounds = array<i64: 24, 8>}, {pipeline_mode = #tpu.pipeline_mode<synchronous>, transform_indices = @transform_15, window_bounds = array<i64: 16, 8>}, {pipeline_mode = #tpu.pipeline_mode<synchronous>, transform_indices = @transform_16, window_bounds = array<i64: 8, 8>}, {pipeline_mode = #tpu.pipeline_mode<synchronous>, transform_indices = @transform_17, window_bounds = array<i64: 24, 1>}, {pipeline_mode = #tpu.pipeline_mode<synchronous>, transform_indices = @transform_18, window_bounds = array<i64: 1, 8>}, {pipeline_mode = #tpu.pipeline_mode<synchronous>, transform_indices = @transform_19, window_bounds = array<i64: 1, 1>}, {transform_indices = @transform_20, window_bounds = array<i64: 1, 1, 256>}]} {
    %c0_i32 = arith.constant 0 : i32
    %0 = arith.cmpi eq, %arg1, %c0_i32 : i32
    %1 = arith.extui %0 : i1 to i32
    %c0_i32_0 = arith.constant 0 : i32
    %2 = arith.cmpi ne, %1, %c0_i32_0 : i32
    scf.if %2 {
      %c0_72 = arith.constant 0 : index
      %c0_73 = arith.constant 0 : index
      %152 = vector.load %arg2[%c0_72, %c0_73] : memref<16x256xf32, #tpu.memory_space<vmem>>, vector<16x256xf32>
      %c0_74 = arith.constant 0 : index
      %c0_75 = arith.constant 0 : index
      %153 = vector.load %arg23[%c0_74, %c0_75] : memref<16x256xf32, #tpu.memory_space<vmem>>, vector<16x256xf32>
      tpu.vector_store %arg23[%c0_74, %c0_75], %152 {strides = array<i32>} : memref<16x256xf32, #tpu.memory_space<vmem>>, vector<16x256xf32>,
      %c0_76 = arith.constant 0 : index
      %c0_77 = arith.constant 0 : index
      %154 = vector.load %arg3[%c0_76, %c0_77] : memref<8x256xf32, #tpu.memory_space<vmem>>, vector<8x256xf32>
      %c0_78 = arith.constant 0 : index
      %c0_79 = arith.constant 0 : index
      %155 = vector.load %arg24[%c0_78, %c0_79] : memref<8x256xf32, #tpu.memory_space<vmem>>, vector<8x256xf32>
      tpu.vector_store %arg24[%c0_78, %c0_79], %154 {strides = array<i32>} : memref<8x256xf32, #tpu.memory_space<vmem>>, vector<8x256xf32>,
      %c0_80 = arith.constant 0 : index
      %c0_81 = arith.constant 0 : index
      %156 = vector.load %arg4[%c0_80, %c0_81] : memref<8x256xf32, #tpu.memory_space<vmem>>, vector<8x256xf32>
      %c0_82 = arith.constant 0 : index
      %c0_83 = arith.constant 0 : index
      %157 = vector.load %arg25[%c0_82, %c0_83] : memref<8x256xf32, #tpu.memory_space<vmem>>, vector<8x256xf32>
      tpu.vector_store %arg25[%c0_82, %c0_83], %156 {strides = array<i32>} : memref<8x256xf32, #tpu.memory_space<vmem>>, vector<8x256xf32>,
    } else {
    }
    %c0 = arith.constant 0 : index
    %c0_1 = arith.constant 0 : index
    %3 = vector.load %arg23[%c0, %c0_1] : memref<16x256xf32, #tpu.memory_space<vmem>>, vector<16x256xf32>
    %c0_2 = arith.constant 0 : index
    %c0_3 = arith.constant 0 : index
    %4 = vector.load %arg7[%c0_2, %c0_3] : memref<48x1xf32, #tpu.memory_space<vmem>>, vector<48x1xf32>
    %c0_4 = arith.constant 0 : index
    %c0_5 = arith.constant 0 : index
    %5 = vector.load %arg5[%c0_4, %c0_5] : memref<32x16xf32, #tpu.memory_space<vmem>>, vector<32x16xf32>
    %cst = arith.constant dense<0.000000e+00> : vector<32x256xf32>
    %6 = tpu.matmul %5, %3, %cst {dimension_numbers = #tpu.dot_dimension_numbers<[1], [0], [0], [1], [0, 0, 1, 1], [], []>} : vector<32x16xf32>, vector<16x256xf32>, vector<32x256xf32> -> vector<32x256xf32>
    %7 = vector.extract_strided_slice %6 {offsets = [0, 0], sizes = [16, 256], strides = [1, 1]} : vector<32x256xf32> to vector<16x256xf32>
    %8 = vector.extract_strided_slice %4 {offsets = [0, 0], sizes = [16, 1], strides = [1, 1]} : vector<48x1xf32> to vector<16x1xf32>
    %9 = vector.broadcast %8 : vector<16x1xf32> to vector<16x256xf32>
    %10 = arith.addf %7, %9 : vector<16x256xf32>
    %11 = vector.extract_strided_slice %6 {offsets = [16, 0], sizes = [16, 256], strides = [1, 1]} : vector<32x256xf32> to vector<16x256xf32>
    %12 = vector.extract_strided_slice %4 {offsets = [16, 0], sizes = [16, 1], strides = [1, 1]} : vector<48x1xf32> to vector<16x1xf32>
    %13 = vector.broadcast %12 : vector<16x1xf32> to vector<16x256xf32>
    %14 = arith.addf %11, %13 : vector<16x256xf32>
    %15 = vector.extract_strided_slice %4 {offsets = [32, 0], sizes = [16, 1], strides = [1, 1]} : vector<48x1xf32> to vector<16x1xf32>
    %16 = arith.negf %10 : vector<16x256xf32>
    %17 = math.exp %16 : vector<16x256xf32>
    %cst_6 = arith.constant 1.000000e+00 : f32
    %18 = vector.broadcast %cst_6 : f32 to vector<16x256xf32>
    %19 = arith.addf %18, %17 : vector<16x256xf32>
    %20 = arith.divf %18, %19 : vector<16x256xf32>
    %21 = arith.negf %14 : vector<16x256xf32>
    %22 = math.exp %21 : vector<16x256xf32>
    %cst_7 = arith.constant 1.000000e+00 : f32
    %23 = vector.broadcast %cst_7 : f32 to vector<16x256xf32>
    %24 = arith.addf %23, %22 : vector<16x256xf32>
    %25 = arith.divf %23, %24 : vector<16x256xf32>
    %c0_8 = arith.constant 0 : index
    %c0_9 = arith.constant 0 : index
    %26 = vector.load %arg6[%c0_8, %c0_9] : memref<16x16xf32, #tpu.memory_space<vmem>>, vector<16x16xf32>
    %27 = arith.mulf %25, %3 : vector<16x256xf32>
    %cst_10 = arith.constant dense<0.000000e+00> : vector<16x256xf32>
    %28 = tpu.matmul %26, %27, %cst_10 {dimension_numbers = #tpu.dot_dimension_numbers<[1], [0], [0], [1], [0, 0, 1, 1], [], []>} : vector<16x16xf32>, vector<16x256xf32>, vector<16x256xf32> -> vector<16x256xf32>
    %29 = vector.broadcast %15 : vector<16x1xf32> to vector<16x256xf32>
    %30 = arith.addf %29, %28 : vector<16x256xf32>
    %31 = math.tanh %30 : vector<16x256xf32>
    %cst_11 = arith.constant 1.000000e+00 : f32
    %32 = vector.broadcast %cst_11 : f32 to vector<16x256xf32>
    %33 = arith.subf %32, %20 : vector<16x256xf32>
    %34 = arith.mulf %33, %31 : vector<16x256xf32>
    %35 = arith.mulf %20, %3 : vector<16x256xf32>
    %36 = arith.addf %34, %35 : vector<16x256xf32>
    %c0_12 = arith.constant 0 : index
    %c0_13 = arith.constant 0 : index
    %37 = vector.load %arg23[%c0_12, %c0_13] : memref<16x256xf32, #tpu.memory_space<vmem>>, vector<16x256xf32>
    tpu.vector_store %arg23[%c0_12, %c0_13], %36 {strides = array<i32>} : memref<16x256xf32, #tpu.memory_space<vmem>>, vector<16x256xf32>,
    %c0_14 = arith.constant 0 : index
    %c0_15 = arith.constant 0 : index
    %38 = vector.load %arg8[%c0_14, %c0_15] : memref<8x16xf32, #tpu.memory_space<vmem>>, vector<8x16xf32>
    %cst_16 = arith.constant dense<0.000000e+00> : vector<8x256xf32>
    %39 = tpu.matmul %38, %36, %cst_16 {dimension_numbers = #tpu.dot_dimension_numbers<[1], [0], [0], [1], [0, 0, 1, 1], [], []>} : vector<8x16xf32>, vector<16x256xf32>, vector<8x256xf32> -> vector<8x256xf32>
    %c0_17 = arith.constant 0 : index
    %c0_18 = arith.constant 0 : index
    %40 = vector.load %arg9[%c0_17, %c0_18] : memref<8x1xf32, #tpu.memory_space<vmem>>, vector<8x1xf32>
    %41 = vector.broadcast %40 : vector<8x1xf32> to vector<8x256xf32>
    %42 = arith.addf %39, %41 : vector<8x256xf32>
    %cst_19 = arith.constant 0.000000e+00 : f32
    %43 = vector.broadcast %cst_19 : f32 to vector<8x256xf32>
    %44 = arith.cmpf oge, %42, %43 : vector<8x256xf32>
    %cst_20 = arith.constant 2.000000e-01 : f32
    %45 = vector.broadcast %cst_20 : f32 to vector<8x256xf32>
    %46 = arith.mulf %45, %42 : vector<8x256xf32>
    %47 = arith.select %44, %42, %46 : vector<8x256xi1>, vector<8x256xf32>
    %c0_21 = arith.constant 0 : index
    %c0_22 = arith.constant 0 : index
    %48 = vector.load %arg24[%c0_21, %c0_22] : memref<8x256xf32, #tpu.memory_space<vmem>>, vector<8x256xf32>
    %c0_23 = arith.constant 0 : index
    %c0_24 = arith.constant 0 : index
    %49 = vector.load %arg13[%c0_23, %c0_24] : memref<24x1xf32, #tpu.memory_space<vmem>>, vector<24x1xf32>
    %c0_25 = arith.constant 0 : index
    %c0_26 = arith.constant 0 : index
    %50 = vector.load %arg11[%c0_25, %c0_26] : memref<16x8xf32, #tpu.memory_space<vmem>>, vector<16x8xf32>
    %cst_27 = arith.constant dense<0.000000e+00> : vector<16x256xf32>
    %51 = tpu.matmul %50, %48, %cst_27 {dimension_numbers = #tpu.dot_dimension_numbers<[1], [0], [0], [1], [0, 0, 1, 1], [], []>} : vector<16x8xf32>, vector<8x256xf32>, vector<16x256xf32> -> vector<16x256xf32>
    %c0_28 = arith.constant 0 : index
    %c0_29 = arith.constant 0 : index
    %52 = vector.load %arg10[%c0_28, %c0_29] : memref<24x8xf32, #tpu.memory_space<vmem>>, vector<24x8xf32>
    %cst_30 = arith.constant dense<0.000000e+00> : vector<24x256xf32>
    %53 = tpu.matmul %52, %47, %cst_30 {dimension_numbers = #tpu.dot_dimension_numbers<[1], [0], [0], [1], [0, 0, 1, 1], [], []>} : vector<24x8xf32>, vector<8x256xf32>, vector<24x256xf32> -> vector<24x256xf32>
    %54 = vector.extract_strided_slice %53 {offsets = [0, 0], sizes = [8, 256], strides = [1, 1]} : vector<24x256xf32> to vector<8x256xf32>
    %55 = vector.extract_strided_slice %51 {offsets = [0, 0], sizes = [8, 256], strides = [1, 1]} : vector<16x256xf32> to vector<8x256xf32>
    %56 = arith.addf %54, %55 : vector<8x256xf32>
    %57 = vector.extract_strided_slice %49 {offsets = [0, 0], sizes = [8, 1], strides = [1, 1]} : vector<24x1xf32> to vector<8x1xf32>
    %58 = vector.broadcast %57 : vector<8x1xf32> to vector<8x256xf32>
    %59 = arith.addf %56, %58 : vector<8x256xf32>
    %60 = vector.extract_strided_slice %53 {offsets = [8, 0], sizes = [8, 256], strides = [1, 1]} : vector<24x256xf32> to vector<8x256xf32>
    %61 = vector.extract_strided_slice %51 {offsets = [8, 0], sizes = [8, 256], strides = [1, 1]} : vector<16x256xf32> to vector<8x256xf32>
    %62 = arith.addf %60, %61 : vector<8x256xf32>
    %63 = vector.extract_strided_slice %49 {offsets = [8, 0], sizes = [8, 1], strides = [1, 1]} : vector<24x1xf32> to vector<8x1xf32>
    %64 = vector.broadcast %63 : vector<8x1xf32> to vector<8x256xf32>
    %65 = arith.addf %62, %64 : vector<8x256xf32>
    %66 = vector.extract_strided_slice %53 {offsets = [16, 0], sizes = [8, 256], strides = [1, 1]} : vector<24x256xf32> to vector<8x256xf32>
    %67 = vector.extract_strided_slice %49 {offsets = [16, 0], sizes = [8, 1], strides = [1, 1]} : vector<24x1xf32> to vector<8x1xf32>
    %68 = vector.broadcast %67 : vector<8x1xf32> to vector<8x256xf32>
    %69 = arith.addf %66, %68 : vector<8x256xf32>
    %70 = arith.negf %59 : vector<8x256xf32>
    %71 = math.exp %70 : vector<8x256xf32>
    %cst_31 = arith.constant 1.000000e+00 : f32
    %72 = vector.broadcast %cst_31 : f32 to vector<8x256xf32>
    %73 = arith.addf %72, %71 : vector<8x256xf32>
    %74 = arith.divf %72, %73 : vector<8x256xf32>
    %75 = arith.negf %65 : vector<8x256xf32>
    %76 = math.exp %75 : vector<8x256xf32>
    %cst_32 = arith.constant 1.000000e+00 : f32
    %77 = vector.broadcast %cst_32 : f32 to vector<8x256xf32>
    %78 = arith.addf %77, %76 : vector<8x256xf32>
    %79 = arith.divf %77, %78 : vector<8x256xf32>
    %c0_33 = arith.constant 0 : index
    %c0_34 = arith.constant 0 : index
    %80 = vector.load %arg12[%c0_33, %c0_34] : memref<8x8xf32, #tpu.memory_space<vmem>>, vector<8x8xf32>
    %81 = arith.mulf %79, %48 : vector<8x256xf32>
    %cst_35 = arith.constant dense<0.000000e+00> : vector<8x256xf32>
    %82 = tpu.matmul %80, %81, %cst_35 {dimension_numbers = #tpu.dot_dimension_numbers<[1], [0], [0], [1], [0, 0, 1, 1], [], []>} : vector<8x8xf32>, vector<8x256xf32>, vector<8x256xf32> -> vector<8x256xf32>
    %83 = arith.addf %69, %82 : vector<8x256xf32>
    %84 = math.tanh %83 : vector<8x256xf32>
    %cst_36 = arith.constant 1.000000e+00 : f32
    %85 = vector.broadcast %cst_36 : f32 to vector<8x256xf32>
    %86 = arith.subf %85, %74 : vector<8x256xf32>
    %87 = arith.mulf %86, %84 : vector<8x256xf32>
    %88 = arith.mulf %74, %48 : vector<8x256xf32>
    %89 = arith.addf %87, %88 : vector<8x256xf32>
    %c0_37 = arith.constant 0 : index
    %c0_38 = arith.constant 0 : index
    %90 = vector.load %arg24[%c0_37, %c0_38] : memref<8x256xf32, #tpu.memory_space<vmem>>, vector<8x256xf32>
    tpu.vector_store %arg24[%c0_37, %c0_38], %89 {strides = array<i32>} : memref<8x256xf32, #tpu.memory_space<vmem>>, vector<8x256xf32>,
    %c0_39 = arith.constant 0 : index
    %c0_40 = arith.constant 0 : index
    %91 = vector.load %arg14[%c0_39, %c0_40] : memref<8x8xf32, #tpu.memory_space<vmem>>, vector<8x8xf32>
    %cst_41 = arith.constant dense<0.000000e+00> : vector<8x256xf32>
    %92 = tpu.matmul %91, %89, %cst_41 {dimension_numbers = #tpu.dot_dimension_numbers<[1], [0], [0], [1], [0, 0, 1, 1], [], []>} : vector<8x8xf32>, vector<8x256xf32>, vector<8x256xf32> -> vector<8x256xf32>
    %c0_42 = arith.constant 0 : index
    %c0_43 = arith.constant 0 : index
    %93 = vector.load %arg15[%c0_42, %c0_43] : memref<8x1xf32, #tpu.memory_space<vmem>>, vector<8x1xf32>
    %94 = vector.broadcast %93 : vector<8x1xf32> to vector<8x256xf32>
    %95 = arith.addf %92, %94 : vector<8x256xf32>
    %cst_44 = arith.constant 0.000000e+00 : f32
    %96 = vector.broadcast %cst_44 : f32 to vector<8x256xf32>
    %97 = arith.cmpf oge, %95, %96 : vector<8x256xf32>
    %cst_45 = arith.constant 2.000000e-01 : f32
    %98 = vector.broadcast %cst_45 : f32 to vector<8x256xf32>
    %99 = arith.mulf %98, %95 : vector<8x256xf32>
    %100 = arith.select %97, %95, %99 : vector<8x256xi1>, vector<8x256xf32>
    %c0_46 = arith.constant 0 : index
    %c0_47 = arith.constant 0 : index
    %101 = vector.load %arg25[%c0_46, %c0_47] : memref<8x256xf32, #tpu.memory_space<vmem>>, vector<8x256xf32>
    %c0_48 = arith.constant 0 : index
    %c0_49 = arith.constant 0 : index
    %102 = vector.load %arg19[%c0_48, %c0_49] : memref<24x1xf32, #tpu.memory_space<vmem>>, vector<24x1xf32>
    %c0_50 = arith.constant 0 : index
    %c0_51 = arith.constant 0 : index
    %103 = vector.load %arg17[%c0_50, %c0_51] : memref<16x8xf32, #tpu.memory_space<vmem>>, vector<16x8xf32>
    %cst_52 = arith.constant dense<0.000000e+00> : vector<16x256xf32>
    %104 = tpu.matmul %103, %101, %cst_52 {dimension_numbers = #tpu.dot_dimension_numbers<[1], [0], [0], [1], [0, 0, 1, 1], [], []>} : vector<16x8xf32>, vector<8x256xf32>, vector<16x256xf32> -> vector<16x256xf32>
    %c0_53 = arith.constant 0 : index
    %c0_54 = arith.constant 0 : index
    %105 = vector.load %arg16[%c0_53, %c0_54] : memref<24x8xf32, #tpu.memory_space<vmem>>, vector<24x8xf32>
    %cst_55 = arith.constant dense<0.000000e+00> : vector<24x256xf32>
    %106 = tpu.matmul %105, %100, %cst_55 {dimension_numbers = #tpu.dot_dimension_numbers<[1], [0], [0], [1], [0, 0, 1, 1], [], []>} : vector<24x8xf32>, vector<8x256xf32>, vector<24x256xf32> -> vector<24x256xf32>
    %107 = vector.extract_strided_slice %106 {offsets = [0, 0], sizes = [8, 256], strides = [1, 1]} : vector<24x256xf32> to vector<8x256xf32>
    %108 = vector.extract_strided_slice %104 {offsets = [0, 0], sizes = [8, 256], strides = [1, 1]} : vector<16x256xf32> to vector<8x256xf32>
    %109 = arith.addf %107, %108 : vector<8x256xf32>
    %110 = vector.extract_strided_slice %102 {offsets = [0, 0], sizes = [8, 1], strides = [1, 1]} : vector<24x1xf32> to vector<8x1xf32>
    %111 = vector.broadcast %110 : vector<8x1xf32> to vector<8x256xf32>
    %112 = arith.addf %109, %111 : vector<8x256xf32>
    %113 = vector.extract_strided_slice %106 {offsets = [8, 0], sizes = [8, 256], strides = [1, 1]} : vector<24x256xf32> to vector<8x256xf32>
    %114 = vector.extract_strided_slice %104 {offsets = [8, 0], sizes = [8, 256], strides = [1, 1]} : vector<16x256xf32> to vector<8x256xf32>
    %115 = arith.addf %113, %114 : vector<8x256xf32>
    %116 = vector.extract_strided_slice %102 {offsets = [8, 0], sizes = [8, 1], strides = [1, 1]} : vector<24x1xf32> to vector<8x1xf32>
    %117 = vector.broadcast %116 : vector<8x1xf32> to vector<8x256xf32>
    %118 = arith.addf %115, %117 : vector<8x256xf32>
    %119 = vector.extract_strided_slice %106 {offsets = [16, 0], sizes = [8, 256], strides = [1, 1]} : vector<24x256xf32> to vector<8x256xf32>
    %120 = vector.extract_strided_slice %102 {offsets = [16, 0], sizes = [8, 1], strides = [1, 1]} : vector<24x1xf32> to vector<8x1xf32>
    %121 = vector.broadcast %120 : vector<8x1xf32> to vector<8x256xf32>
    %122 = arith.addf %119, %121 : vector<8x256xf32>
    %123 = arith.negf %112 : vector<8x256xf32>
    %124 = math.exp %123 : vector<8x256xf32>
    %cst_56 = arith.constant 1.000000e+00 : f32
    %125 = vector.broadcast %cst_56 : f32 to vector<8x256xf32>
    %126 = arith.addf %125, %124 : vector<8x256xf32>
    %127 = arith.divf %125, %126 : vector<8x256xf32>
    %128 = arith.negf %118 : vector<8x256xf32>
    %129 = math.exp %128 : vector<8x256xf32>
    %cst_57 = arith.constant 1.000000e+00 : f32
    %130 = vector.broadcast %cst_57 : f32 to vector<8x256xf32>
    %131 = arith.addf %130, %129 : vector<8x256xf32>
    %132 = arith.divf %130, %131 : vector<8x256xf32>
    %c0_58 = arith.constant 0 : index
    %c0_59 = arith.constant 0 : index
    %133 = vector.load %arg18[%c0_58, %c0_59] : memref<8x8xf32, #tpu.memory_space<vmem>>, vector<8x8xf32>
    %134 = arith.mulf %132, %101 : vector<8x256xf32>
    %cst_60 = arith.constant dense<0.000000e+00> : vector<8x256xf32>
    %135 = tpu.matmul %133, %134, %cst_60 {dimension_numbers = #tpu.dot_dimension_numbers<[1], [0], [0], [1], [0, 0, 1, 1], [], []>} : vector<8x8xf32>, vector<8x256xf32>, vector<8x256xf32> -> vector<8x256xf32>
    %136 = arith.addf %122, %135 : vector<8x256xf32>
    %137 = math.tanh %136 : vector<8x256xf32>
    %cst_61 = arith.constant 1.000000e+00 : f32
    %138 = vector.broadcast %cst_61 : f32 to vector<8x256xf32>
    %139 = arith.subf %138, %127 : vector<8x256xf32>
    %140 = arith.mulf %139, %137 : vector<8x256xf32>
    %141 = arith.mulf %127, %101 : vector<8x256xf32>
    %142 = arith.addf %140, %141 : vector<8x256xf32>
    %c0_62 = arith.constant 0 : index
    %c0_63 = arith.constant 0 : index
    %143 = vector.load %arg25[%c0_62, %c0_63] : memref<8x256xf32, #tpu.memory_space<vmem>>, vector<8x256xf32>
    tpu.vector_store %arg25[%c0_62, %c0_63], %142 {strides = array<i32>} : memref<8x256xf32, #tpu.memory_space<vmem>>, vector<8x256xf32>,
    %c0_64 = arith.constant 0 : index
    %c0_65 = arith.constant 0 : index
    %144 = vector.load %arg20[%c0_64, %c0_65] : memref<1x8xf32, #tpu.memory_space<vmem>>, vector<1x8xf32>
    %cst_66 = arith.constant dense<0.000000e+00> : vector<1x256xf32>
    %145 = tpu.matmul %144, %142, %cst_66 {dimension_numbers = #tpu.dot_dimension_numbers<[1], [0], [0], [1], [0, 0, 1, 1], [], []>} : vector<1x8xf32>, vector<8x256xf32>, vector<1x256xf32> -> vector<1x256xf32>
    %c0_67 = arith.constant 0 : index
    %c0_68 = arith.constant 0 : index
    %146 = vector.load %arg21[%c0_67, %c0_68] : memref<1x1xf32, #tpu.memory_space<vmem>>, vector<1x1xf32>
    %147 = vector.broadcast %146 : vector<1x1xf32> to vector<1x256xf32>
    %148 = arith.addf %145, %147 : vector<1x256xf32>
    %c0_69 = arith.constant 0 : index
    %c0_70 = arith.constant 0 : index
    %c0_71 = arith.constant 0 : index
    %149 = vector.load %arg22[%c0_69, %c0_70, %c0_71] : memref<1x1x256xf32, #tpu.memory_space<vmem>>, vector<1x1x256xf32>
    %150 = vector.shape_cast %149 : vector<1x1x256xf32> to vector<1x256xf32>
    %151 = vector.shape_cast %148 : vector<1x256xf32> to vector<1x1x256xf32>
    tpu.vector_store %arg22[%c0_69, %c0_70, %c0_71], %151 {strides = array<i32>} : memref<1x1x256xf32, #tpu.memory_space<vmem>>, vector<1x1x256xf32>,
    return
  }
  func.func @transform_0(%arg0: i32, %arg1: i32) -> (i32, i32) {
    %c0_i32 = arith.constant 0 : i32
    %c0_i32_0 = arith.constant 0 : i32
    return %c0_i32, %arg0 : i32, i32
  }
  func.func @transform_1(%arg0: i32, %arg1: i32) -> (i32, i32) {
    %c0_i32 = arith.constant 0 : i32
    %c0_i32_0 = arith.constant 0 : i32
    return %c0_i32, %arg0 : i32, i32
  }
  func.func @transform_2(%arg0: i32, %arg1: i32) -> (i32, i32) {
    %c0_i32 = arith.constant 0 : i32
    %c0_i32_0 = arith.constant 0 : i32
    return %c0_i32, %arg0 : i32, i32
  }
  func.func @transform_3(%arg0: i32, %arg1: i32) -> (i32, i32) {
    %c0_i32 = arith.constant 0 : i32
    %c0_i32_0 = arith.constant 0 : i32
    %c0_i32_1 = arith.constant 0 : i32
    return %c0_i32, %c0_i32_0 : i32, i32
  }
  func.func @transform_4(%arg0: i32, %arg1: i32) -> (i32, i32) {
    %c0_i32 = arith.constant 0 : i32
    %c0_i32_0 = arith.constant 0 : i32
    %c0_i32_1 = arith.constant 0 : i32
    return %c0_i32, %c0_i32_0 : i32, i32
  }
  func.func @transform_5(%arg0: i32, %arg1: i32) -> (i32, i32) {
    %c0_i32 = arith.constant 0 : i32
    %c0_i32_0 = arith.constant 0 : i32
    %c0_i32_1 = arith.constant 0 : i32
    return %c0_i32, %c0_i32_0 : i32, i32
  }
  func.func @transform_6(%arg0: i32, %arg1: i32) -> (i32, i32) {
    %c0_i32 = arith.constant 0 : i32
    %c0_i32_0 = arith.constant 0 : i32
    %c0_i32_1 = arith.constant 0 : i32
    return %c0_i32, %c0_i32_0 : i32, i32
  }
  func.func @transform_7(%arg0: i32, %arg1: i32) -> (i32, i32) {
    %c0_i32 = arith.constant 0 : i32
    %c0_i32_0 = arith.constant 0 : i32
    %c0_i32_1 = arith.constant 0 : i32
    return %c0_i32, %c0_i32_0 : i32, i32
  }
  func.func @transform_8(%arg0: i32, %arg1: i32) -> (i32, i32) {
    %c0_i32 = arith.constant 0 : i32
    %c0_i32_0 = arith.constant 0 : i32
    %c0_i32_1 = arith.constant 0 : i32
    return %c0_i32, %c0_i32_0 : i32, i32
  }
  func.func @transform_9(%arg0: i32, %arg1: i32) -> (i32, i32) {
    %c0_i32 = arith.constant 0 : i32
    %c0_i32_0 = arith.constant 0 : i32
    %c0_i32_1 = arith.constant 0 : i32
    return %c0_i32, %c0_i32_0 : i32, i32
  }
  func.func @transform_10(%arg0: i32, %arg1: i32) -> (i32, i32) {
    %c0_i32 = arith.constant 0 : i32
    %c0_i32_0 = arith.constant 0 : i32
    %c0_i32_1 = arith.constant 0 : i32
    return %c0_i32, %c0_i32_0 : i32, i32
  }
  func.func @transform_11(%arg0: i32, %arg1: i32) -> (i32, i32) {
    %c0_i32 = arith.constant 0 : i32
    %c0_i32_0 = arith.constant 0 : i32
    %c0_i32_1 = arith.constant 0 : i32
    return %c0_i32, %c0_i32_0 : i32, i32
  }
  func.func @transform_12(%arg0: i32, %arg1: i32) -> (i32, i32) {
    %c0_i32 = arith.constant 0 : i32
    %c0_i32_0 = arith.constant 0 : i32
    %c0_i32_1 = arith.constant 0 : i32
    return %c0_i32, %c0_i32_0 : i32, i32
  }
  func.func @transform_13(%arg0: i32, %arg1: i32) -> (i32, i32) {
    %c0_i32 = arith.constant 0 : i32
    %c0_i32_0 = arith.constant 0 : i32
    %c0_i32_1 = arith.constant 0 : i32
    return %c0_i32, %c0_i32_0 : i32, i32
  }
  func.func @transform_14(%arg0: i32, %arg1: i32) -> (i32, i32) {
    %c0_i32 = arith.constant 0 : i32
    %c0_i32_0 = arith.constant 0 : i32
    %c0_i32_1 = arith.constant 0 : i32
    return %c0_i32, %c0_i32_0 : i32, i32
  }
  func.func @transform_15(%arg0: i32, %arg1: i32) -> (i32, i32) {
    %c0_i32 = arith.constant 0 : i32
    %c0_i32_0 = arith.constant 0 : i32
    %c0_i32_1 = arith.constant 0 : i32
    return %c0_i32, %c0_i32_0 : i32, i32
  }
  func.func @transform_16(%arg0: i32, %arg1: i32) -> (i32, i32) {
    %c0_i32 = arith.constant 0 : i32
    %c0_i32_0 = arith.constant 0 : i32
    %c0_i32_1 = arith.constant 0 : i32
    return %c0_i32, %c0_i32_0 : i32, i32
  }
  func.func @transform_17(%arg0: i32, %arg1: i32) -> (i32, i32) {
    %c0_i32 = arith.constant 0 : i32
    %c0_i32_0 = arith.constant 0 : i32
    %c0_i32_1 = arith.constant 0 : i32
    return %c0_i32, %c0_i32_0 : i32, i32
  }
  func.func @transform_18(%arg0: i32, %arg1: i32) -> (i32, i32) {
    %c0_i32 = arith.constant 0 : i32
    %c0_i32_0 = arith.constant 0 : i32
    %c0_i32_1 = arith.constant 0 : i32
    return %c0_i32, %c0_i32_0 : i32, i32
  }
  func.func @transform_19(%arg0: i32, %arg1: i32) -> (i32, i32) {
    %c0_i32 = arith.constant 0 : i32
    %c0_i32_0 = arith.constant 0 : i32
    %c0_i32_1 = arith.constant 0 : i32
    return %c0_i32, %c0_i32_0 : i32, i32
  }
  func.func @transform_20(%arg0: i32, %arg1: i32) -> (i32, i32, i32) {
    %c0_i32 = arith.constant 0 : i32
    %c0_i32_0 = arith.constant 0 : i32
    return %arg1, %c0_i32, %arg0 : i32, i32, i32
  }
}

</mosaic_0001>

<llo_original>
// kernel: tpu_custom_call.1
$region0: #{tpu_custom_call.1}
  #allocation0 [shape = 'u32[]', space=smem, size = 0x4, offset = 0x4, fixed_abs, tag = 'smem constant byte address 0x4 - core index']
  #allocation1 [shape = 'u32[72,128]{1,0:T(1,128)}', space=vmem, size = 0x9000, scoped, tag = 'internal scratch']
  #allocation2 [shape = 'f32[16,256]{1,0:T(8,128)}', space=vmem, size = 0x4000, scoped, tag = 'scratch operand']
  #allocation3 [shape = 'f32[8,256]{1,0:T(8,128)}', space=vmem, size = 0x2000, scoped, tag = 'scratch operand']
  #allocation4 [shape = 'f32[8,256]{1,0:T(8,128)}', space=vmem, size = 0x2000, scoped, tag = 'scratch operand']
  #allocation5 [shape = 'f32[1,1]{1,0:T(1,128)S(1)}', space=vmem, size = 0x200, scoped, tag = 'scoped memory for tpu_custom_call.1']
  %s0 = inlined_call_operand.vmem [shape: f32[16,512], index: 0, kind: input, shape index: {}]
  %s1 = inlined_call_operand.vmem [shape: f32[8,512], index: 1, kind: input, shape index: {}]
  %s2 = inlined_call_operand.vmem [shape: f32[8,512], index: 2, kind: input, shape index: {}]
  %s3 = inlined_call_operand.vmem [shape: f32[32,16], index: 3, kind: input, shape index: {}]
  %s4 = inlined_call_operand.vmem [shape: f32[16,16], index: 4, kind: input, shape index: {}]
  %s5 = inlined_call_operand.vmem [shape: f32[48,1], index: 5, kind: input, shape index: {}]
  %s6 = inlined_call_operand.vmem [shape: f32[8,16], index: 6, kind: input, shape index: {}]
  %s7 = inlined_call_operand.vmem [shape: f32[8,1], index: 7, kind: input, shape index: {}]
  %s8 = inlined_call_operand.vmem [shape: f32[24,8], index: 8, kind: input, shape index: {}]
  %s9 = inlined_call_operand.vmem [shape: f32[16,8], index: 9, kind: input, shape index: {}]
  %s10 = inlined_call_operand.vmem [shape: f32[8,8], index: 10, kind: input, shape index: {}]
  %s11 = inlined_call_operand.vmem [shape: f32[24,1], index: 11, kind: input, shape index: {}]
  %s12 = inlined_call_operand.vmem [shape: f32[8,8], index: 12, kind: input, shape index: {}]
  %s13 = inlined_call_operand.vmem [shape: f32[8,1], index: 13, kind: input, shape index: {}]
  %s14 = inlined_call_operand.vmem [shape: f32[24,8], index: 14, kind: input, shape index: {}]
  %s15 = inlined_call_operand.vmem [shape: f32[16,8], index: 15, kind: input, shape index: {}]
  %s16 = inlined_call_operand.vmem [shape: f32[8,8], index: 16, kind: input, shape index: {}]
  %s17 = inlined_call_operand.vmem [shape: f32[24,1], index: 17, kind: input, shape index: {}]
  %s18 = inlined_call_operand.vmem [shape: f32[1,8], index: 18, kind: input, shape index: {}]
  %s19 = inlined_call_operand.<no memory space> [shape: f32[1,1], index: 19, kind: input, shape index: {}]
  %s20 = inlined_call_operand.hbm [shape: f32[8,1,512], index: 20, kind: output, shape index: {}]
  %s21 = sld [smem:[#allocation0]]
  $region140: #{tpu_custom_call.1} parent=0
    _
  %s23 = ssub.s32 1, %s21
  %s24 = scalar_select 0, %s23, %s21
  %v25 = vstv %s19
  %26 = vst [vmem:[#allocation5] sm:$0x1] %v25
  $region1: #{tpu_custom_call.1} parent=0
    #allocation6 [shape = 'u8[32768]{0}', space=vmem, size = 0x8000, scoped, tag = 'input window, operand 0']
    #allocation7 [shape = 'u8[2048]{0}', space=vmem, size = 0x800, scoped, tag = 'output window, operand 0']
    #allocation8 [shape = 's32[2]{0}', space=sflag, size = 0x8, scoped, tag = 'scoped memory for tpu_custom_call.1']
    %27 = vsyncpa [#allocation8], 0
    %s28 = scalar_lea.sflag [#allocation8], 1
    %29 = vsyncpa %s28, 0
    loop: start=0, step=1, limit=18
    $region2: #{tpu_custom_call.1} parent=1 // loop_pre_header
      _
    $region3: #{tpu_custom_call.1} parent=1 // loop_header
      %s31 = sphi 0, %s35
      %p32 = scmp.ge.s32.totalorder %s31, 18
      %s38 = sphi 0, %s50
      %s39 = sphi 0, %s46
      %s40 = sphi 0, %s38
      %s41 = sphi 0, %s39
      %s42 = sphi 0, %s40
      %s43 = sphi 0, %s41
      %s53 = sphi 0, %s55
      %s56 = sphi 0, %s53
      %s57 = sphi 0, %s56
      %s73 = sphi 0, %s57
      %s79 = sphi 0, %s81
      %s82 = sphi 0, %s79
      %s83 = sphi 0, %s82
      %s99 = sphi 0, %s83
      %s105 = sphi 0, %s107
      %s108 = sphi 0, %s105
      %s109 = sphi 0, %s108
      %s125 = sphi 0, %s109
      %s129 = sphi 0, %s129
      %s131 = sphi 0, %s129
      %s132 = sphi 0, %s131
      %s146 = sphi 0, %s132
      %s150 = sphi 0, %s150
      %s152 = sphi 0, %s150
      %s153 = sphi 0, %s152
      %s167 = sphi 0, %s153
      %s171 = sphi 0, %s171
      %s173 = sphi 0, %s171
      %s174 = sphi 0, %s173
      %s188 = sphi 0, %s174
      %s192 = sphi 0, %s192
      %s194 = sphi 0, %s192
      %s195 = sphi 0, %s194
      %s209 = sphi 0, %s195
      %s213 = sphi 0, %s213
      %s215 = sphi 0, %s213
      %s216 = sphi 0, %s215
      %s230 = sphi 0, %s216
      %s234 = sphi 0, %s234
      %s236 = sphi 0, %s234
      %s237 = sphi 0, %s236
      %s251 = sphi 0, %s237
      %s255 = sphi 0, %s255
      %s257 = sphi 0, %s255
      %s258 = sphi 0, %s257
      %s272 = sphi 0, %s258
      %s276 = sphi 0, %s276
      %s278 = sphi 0, %s276
      %s279 = sphi 0, %s278
      %s293 = sphi 0, %s279
      %s297 = sphi 0, %s297
      %s299 = sphi 0, %s297
      %s300 = sphi 0, %s299
      %s314 = sphi 0, %s300
      %s318 = sphi 0, %s318
      %s320 = sphi 0, %s318
      %s321 = sphi 0, %s320
      %s335 = sphi 0, %s321
      %s339 = sphi 0, %s339
      %s341 = sphi 0, %s339
      %s342 = sphi 0, %s341
      %s356 = sphi 0, %s342
      %s360 = sphi 0, %s360
      %s362 = sphi 0, %s360
      %s363 = sphi 0, %s362
      %s377 = sphi 0, %s363
      %s381 = sphi 0, %s381
      %s383 = sphi 0, %s381
      %s384 = sphi 0, %s383
      %s398 = sphi 0, %s384
      %s402 = sphi 0, %s402
      %s404 = sphi 0, %s402
      %s405 = sphi 0, %s404
      %s419 = sphi 0, %s405
      %s423 = sphi 0, %s423
      %s425 = sphi 0, %s423
      %s426 = sphi 0, %s425
      %s440 = sphi 0, %s426
      %s444 = sphi 0, %s444
      %s446 = sphi 0, %s444
      %s447 = sphi 0, %s446
      %s461 = sphi 0, %s447
      %s465 = sphi 0, %s465
      %s467 = sphi 0, %s465
      %s468 = sphi 0, %s467
      %s482 = sphi 0, %s468
      %s490 = sphi 0, %s492
      %s493 = sphi 0, %s490
      %s494 = sphi 0, %s493
      %s510 = sphi 0, %s494
    $region4: #{tpu_custom_call.1} parent=1 // loop_header_branch
      %34 = sbr.rel (%p32) target = $region8
    $region5: #{tpu_custom_call.1} parent=1 // loop_body
      %s36 = ssub.s32 %s31, 1
      %s37 = ssub.s32 %s31, 2
      %s44 = sadd.s32 1, %s39
      %p45 = scmp.ge.s32.totalorder %s44, 8
      %s46 = scalar_select %p45, 0, %s44
      %s47 = sadd.s32 1, %s38
      %s48 = scalar_select %p45, %s47, %s38
      %p49 = scmp.ge.s32.totalorder %s48, 2
      %s50 = scalar_select %p49, 0, %s48
      %s51 = ssub.s32 %s38, %s50
      %p52 = scmp.eq.s32.totalorder %s51, 0
      %s54 = sadd.s32 %s53, 1
      %s55 = scalar_select %p52, %s53, %s54
      %p58 = pneg %p52
      %p59 = scmp.eq.s32.totalorder %s31, 15
      %p60 = por %p58, %p59
      %p61 = scmp.ne.s32.totalorder %s53, %s56
      %p62 = scmp.eq.s32.totalorder %s31, 0
      %p63 = por %p61, %p62
      %p64 = scmp.ne.s32.totalorder %s53, %s56
      %p65 = scmp.eq.s32.totalorder %s36, 15
      %p66 = por %p64, %p65
      %p67 = scmp.ne.s32.totalorder %s56, %s57
      %p68 = scmp.eq.s32.totalorder %s36, 0
      %p69 = por %p67, %p68
      %p70 = scmp.ne.s32.totalorder %s56, %s57
      %p71 = scmp.eq.s32.totalorder %s37, 15
      %p72 = por %p70, %p71
      %p74 = scmp.ne.s32.totalorder %s57, %s73
      %p75 = scmp.eq.s32.totalorder %s37, 0
      %p76 = por %p74, %p75
      %s77 = ssub.s32 %s38, %s50
      %p78 = scmp.eq.s32.totalorder %s77, 0
      %s80 = sadd.s32 %s79, 1
      %s81 = scalar_select %p78, %s79, %s80
      %p84 = pneg %p78
      %p85 = scmp.eq.s32.totalorder %s31, 15
      %p86 = por %p84, %p85
      %p87 = scmp.ne.s32.totalorder %s79, %s82
      %p88 = scmp.eq.s32.totalorder %s31, 0
      %p89 = por %p87, %p88
      %p90 = scmp.ne.s32.totalorder %s79, %s82
      %p91 = scmp.eq.s32.totalorder %s36, 15
      %p92 = por %p90, %p91
      %p93 = scmp.ne.s32.totalorder %s82, %s83
      %p94 = scmp.eq.s32.totalorder %s36, 0
      %p95 = por %p93, %p94
      %p96 = scmp.ne.s32.totalorder %s82, %s83
      %p97 = scmp.eq.s32.totalorder %s37, 15
      %p98 = por %p96, %p97
      %p100 = scmp.ne.s32.totalorder %s83, %s99
      %p101 = scmp.eq.s32.totalorder %s37, 0
      %p102 = por %p100, %p101
      %s103 = ssub.s32 %s38, %s50
      %p104 = scmp.eq.s32.totalorder %s103, 0
      %s106 = sadd.s32 %s105, 1
      %s107 = scalar_select %p104, %s105, %s106
      %p110 = pneg %p104
      %p111 = scmp.eq.s32.totalorder %s31, 15
      %p112 = por %p110, %p111
      %p113 = scmp.ne.s32.totalorder %s105, %s108
      %p114 = scmp.eq.s32.totalorder %s31, 0
      %p115 = por %p113, %p114
      %p116 = scmp.ne.s32.totalorder %s105, %s108
      %p117 = scmp.eq.s32.totalorder %s36, 15
      %p118 = por %p116, %p117
      %p119 = scmp.ne.s32.totalorder %s108, %s109
      %p120 = scmp.eq.s32.totalorder %s36, 0
      %p121 = por %p119, %p120
      %p122 = scmp.ne.s32.totalorder %s108, %s109
      %p123 = scmp.eq.s32.totalorder %s37, 15
      %p124 = por %p122, %p123
      %p126 = scmp.ne.s32.totalorder %s109, %s125
      %p127 = scmp.eq.s32.totalorder %s37, 0
      %p128 = por %p126, %p127
      %s130 = sadd.s32 %s129, 1
      %p133 = scmp.eq.s32.totalorder %s31, 15
      %p134 = scmp.ne.s32.totalorder %s129, %s131
      %p135 = scmp.eq.s32.totalorder %s31, 0
      %p136 = por %p134, %p135
      %p137 = scmp.ne.s32.totalorder %s129, %s131
      %p138 = scmp.eq.s32.totalorder %s36, 15
      %p139 = por %p137, %p138
      %p140 = scmp.ne.s32.totalorder %s131, %s132
      %p141 = scmp.eq.s32.totalorder %s36, 0
      %p142 = por %p140, %p141
      %p143 = scmp.ne.s32.totalorder %s131, %s132
      %p144 = scmp.eq.s32.totalorder %s37, 15
      %p145 = por %p143, %p144
      %p147 = scmp.ne.s32.totalorder %s132, %s146
      %p148 = scmp.eq.s32.totalorder %s37, 0
      %p149 = por %p147, %p148
      %s151 = sadd.s32 %s150, 1
      %p154 = scmp.eq.s32.totalorder %s31, 15
      %p155 = scmp.ne.s32.totalorder %s150, %s152
      %p156 = scmp.eq.s32.totalorder %s31, 0
      %p157 = por %p155, %p156
      %p158 = scmp.ne.s32.totalorder %s150, %s152
      %p159 = scmp.eq.s32.totalorder %s36, 15
      %p160 = por %p158, %p159
      %p161 = scmp.ne.s32.totalorder %s152, %s153
      %p162 = scmp.eq.s32.totalorder %s36, 0
      %p163 = por %p161, %p162
      %p164 = scmp.ne.s32.totalorder %s152, %s153
      %p165 = scmp.eq.s32.totalorder %s37, 15
      %p166 = por %p164, %p165
      %p168 = scmp.ne.s32.totalorder %s153, %s167
      %p169 = scmp.eq.s32.totalorder %s37, 0
      %p170 = por %p168, %p169
      %s172 = sadd.s32 %s171, 1
      %p175 = scmp.eq.s32.totalorder %s31, 15
      %p176 = scmp.ne.s32.totalorder %s171, %s173
      %p177 = scmp.eq.s32.totalorder %s31, 0
      %p178 = por %p176, %p177
      %p179 = scmp.ne.s32.totalorder %s171, %s173
      %p180 = scmp.eq.s32.totalorder %s36, 15
      %p181 = por %p179, %p180
      %p182 = scmp.ne.s32.totalorder %s173, %s174
      %p183 = scmp.eq.s32.totalorder %s36, 0
      %p184 = por %p182, %p183
      %p185 = scmp.ne.s32.totalorder %s173, %s174
      %p186 = scmp.eq.s32.totalorder %s37, 15
      %p187 = por %p185, %p186
      %p189 = scmp.ne.s32.totalorder %s174, %s188
      %p190 = scmp.eq.s32.totalorder %s37, 0
      %p191 = por %p189, %p190
      %s193 = sadd.s32 %s192, 1
      %p196 = scmp.eq.s32.totalorder %s31, 15
      %p197 = scmp.ne.s32.totalorder %s192, %s194
      %p198 = scmp.eq.s32.totalorder %s31, 0
      %p199 = por %p197, %p198
      %p200 = scmp.ne.s32.totalorder %s192, %s194
      %p201 = scmp.eq.s32.totalorder %s36, 15
      %p202 = por %p200, %p201
      %p203 = scmp.ne.s32.totalorder %s194, %s195
      %p204 = scmp.eq.s32.totalorder %s36, 0
      %p205 = por %p203, %p204
      %p206 = scmp.ne.s32.totalorder %s194, %s195
      %p207 = scmp.eq.s32.totalorder %s37, 15
      %p208 = por %p206, %p207
      %p210 = scmp.ne.s32.totalorder %s195, %s209
      %p211 = scmp.eq.s32.totalorder %s37, 0
      %p212 = por %p210, %p211
      %s214 = sadd.s32 %s213, 1
      %p217 = scmp.eq.s32.totalorder %s31, 15
      %p218 = scmp.ne.s32.totalorder %s213, %s215
      %p219 = scmp.eq.s32.totalorder %s31, 0
      %p220 = por %p218, %p219
      %p221 = scmp.ne.s32.totalorder %s213, %s215
      %p222 = scmp.eq.s32.totalorder %s36, 15
      %p223 = por %p221, %p222
      %p224 = scmp.ne.s32.totalorder %s215, %s216
      %p225 = scmp.eq.s32.totalorder %s36, 0
      %p226 = por %p224, %p225
      %p227 = scmp.ne.s32.totalorder %s215, %s216
      %p228 = scmp.eq.s32.totalorder %s37, 15
      %p229 = por %p227, %p228
      %p231 = scmp.ne.s32.totalorder %s216, %s230
      %p232 = scmp.eq.s32.totalorder %s37, 0
      %p233 = por %p231, %p232
      %s235 = sadd.s32 %s234, 1
      %p238 = scmp.eq.s32.totalorder %s31, 15
      %p239 = scmp.ne.s32.totalorder %s234, %s236
      %p240 = scmp.eq.s32.totalorder %s31, 0
      %p241 = por %p239, %p240
      %p242 = scmp.ne.s32.totalorder %s234, %s236
      %p243 = scmp.eq.s32.totalorder %s36, 15
      %p244 = por %p242, %p243
      %p245 = scmp.ne.s32.totalorder %s236, %s237
      %p246 = scmp.eq.s32.totalorder %s36, 0
      %p247 = por %p245, %p246
      %p248 = scmp.ne.s32.totalorder %s236, %s237
      %p249 = scmp.eq.s32.totalorder %s37, 15
      %p250 = por %p248, %p249
      %p252 = scmp.ne.s32.totalorder %s237, %s251
      %p253 = scmp.eq.s32.totalorder %s37, 0
      %p254 = por %p252, %p253
      %s256 = sadd.s32 %s255, 1
      %p259 = scmp.eq.s32.totalorder %s31, 15
      %p260 = scmp.ne.s32.totalorder %s255, %s257
      %p261 = scmp.eq.s32.totalorder %s31, 0
      %p262 = por %p260, %p261
      %p263 = scmp.ne.s32.totalorder %s255, %s257
      %p264 = scmp.eq.s32.totalorder %s36, 15
      %p265 = por %p263, %p264
      %p266 = scmp.ne.s32.totalorder %s257, %s258
      %p267 = scmp.eq.s32.totalorder %s36, 0
      %p268 = por %p266, %p267
      %p269 = scmp.ne.s32.totalorder %s257, %s258
      %p270 = scmp.eq.s32.totalorder %s37, 15
      %p271 = por %p269, %p270
      %p273 = scmp.ne.s32.totalorder %s258, %s272
      %p274 = scmp.eq.s32.totalorder %s37, 0
      %p275 = por %p273, %p274
      %s277 = sadd.s32 %s276, 1
      %p280 = scmp.eq.s32.totalorder %s31, 15
      %p281 = scmp.ne.s32.totalorder %s276, %s278
      %p282 = scmp.eq.s32.totalorder %s31, 0
      %p283 = por %p281, %p282
      %p284 = scmp.ne.s32.totalorder %s276, %s278
      %p285 = scmp.eq.s32.totalorder %s36, 15
      %p286 = por %p284, %p285
      %p287 = scmp.ne.s32.totalorder %s278, %s279
      %p288 = scmp.eq.s32.totalorder %s36, 0
      %p289 = por %p287, %p288
      %p290 = scmp.ne.s32.totalorder %s278, %s279
      %p291 = scmp.eq.s32.totalorder %s37, 15
      %p292 = por %p290, %p291
      %p294 = scmp.ne.s32.totalorder %s279, %s293
      %p295 = scmp.eq.s32.totalorder %s37, 0
      %p296 = por %p294, %p295
      %s298 = sadd.s32 %s297, 1
      %p301 = scmp.eq.s32.totalorder %s31, 15
      %p302 = scmp.ne.s32.totalorder %s297, %s299
      %p303 = scmp.eq.s32.totalorder %s31, 0
      %p304 = por %p302, %p303
      %p305 = scmp.ne.s32.totalorder %s297, %s299
      %p306 = scmp.eq.s32.totalorder %s36, 15
      %p307 = por %p305, %p306
      %p308 = scmp.ne.s32.totalorder %s299, %s300
      %p309 = scmp.eq.s32.totalorder %s36, 0
      %p310 = por %p308, %p309
      %p311 = scmp.ne.s32.totalorder %s299, %s300
      %p312 = scmp.eq.s32.totalorder %s37, 15
      %p313 = por %p311, %p312
      %p315 = scmp.ne.s32.totalorder %s300, %s314
      %p316 = scmp.eq.s32.totalorder %s37, 0
      %p317 = por %p315, %p316
      %s319 = sadd.s32 %s318, 1
      %p322 = scmp.eq.s32.totalorder %s31, 15
      %p323 = scmp.ne.s32.totalorder %s318, %s320
      %p324 = scmp.eq.s32.totalorder %s31, 0
      %p325 = por %p323, %p324
      %p326 = scmp.ne.s32.totalorder %s318, %s320
      %p327 = scmp.eq.s32.totalorder %s36, 15
      %p328 = por %p326, %p327
      %p329 = scmp.ne.s32.totalorder %s320, %s321
      %p330 = scmp.eq.s32.totalorder %s36, 0
      %p331 = por %p329, %p330
      %p332 = scmp.ne.s32.totalorder %s320, %s321
      %p333 = scmp.eq.s32.totalorder %s37, 15
      %p334 = por %p332, %p333
      %p336 = scmp.ne.s32.totalorder %s321, %s335
      %p337 = scmp.eq.s32.totalorder %s37, 0
      %p338 = por %p336, %p337
      %s340 = sadd.s32 %s339, 1
      %p343 = scmp.eq.s32.totalorder %s31, 15
      %p344 = scmp.ne.s32.totalorder %s339, %s341
      %p345 = scmp.eq.s32.totalorder %s31, 0
      %p346 = por %p344, %p345
      %p347 = scmp.ne.s32.totalorder %s339, %s341
      %p348 = scmp.eq.s32.totalorder %s36, 15
      %p349 = por %p347, %p348
      %p350 = scmp.ne.s32.totalorder %s341, %s342
      %p351 = scmp.eq.s32.totalorder %s36, 0
      %p352 = por %p350, %p351
      %p353 = scmp.ne.s32.totalorder %s341, %s342
      %p354 = scmp.eq.s32.totalorder %s37, 15
      %p355 = por %p353, %p354
      %p357 = scmp.ne.s32.totalorder %s342, %s356
      %p358 = scmp.eq.s32.totalorder %s37, 0
      %p359 = por %p357, %p358
      %s361 = sadd.s32 %s360, 1
      %p364 = scmp.eq.s32.totalorder %s31, 15
      %p365 = scmp.ne.s32.totalorder %s360, %s362
      %p366 = scmp.eq.s32.totalorder %s31, 0
      %p367 = por %p365, %p366
      %p368 = scmp.ne.s32.totalorder %s360, %s362
      %p369 = scmp.eq.s32.totalorder %s36, 15
      %p370 = por %p368, %p369
      %p371 = scmp.ne.s32.totalorder %s362, %s363
      %p372 = scmp.eq.s32.totalorder %s36, 0
      %p373 = por %p371, %p372
      %p374 = scmp.ne.s32.totalorder %s362, %s363
      %p375 = scmp.eq.s32.totalorder %s37, 15
      %p376 = por %p374, %p375
      %p378 = scmp.ne.s32.totalorder %s363, %s377
      %p379 = scmp.eq.s32.totalorder %s37, 0
      %p380 = por %p378, %p379
      %s382 = sadd.s32 %s381, 1
      %p385 = scmp.eq.s32.totalorder %s31, 15
      %p386 = scmp.ne.s32.totalorder %s381, %s383
      %p387 = scmp.eq.s32.totalorder %s31, 0
      %p388 = por %p386, %p387
      %p389 = scmp.ne.s32.totalorder %s381, %s383
      %p390 = scmp.eq.s32.totalorder %s36, 15
      %p391 = por %p389, %p390
      %p392 = scmp.ne.s32.totalorder %s383, %s384
      %p393 = scmp.eq.s32.totalorder %s36, 0
      %p394 = por %p392, %p393
      %p395 = scmp.ne.s32.totalorder %s383, %s384
      %p396 = scmp.eq.s32.totalorder %s37, 15
      %p397 = por %p395, %p396
      %p399 = scmp.ne.s32.totalorder %s384, %s398
      %p400 = scmp.eq.s32.totalorder %s37, 0
      %p401 = por %p399, %p400
      %s403 = sadd.s32 %s402, 1
      %p406 = scmp.eq.s32.totalorder %s31, 15
      %p407 = scmp.ne.s32.totalorder %s402, %s404
      %p408 = scmp.eq.s32.totalorder %s31, 0
      %p409 = por %p407, %p408
      %p410 = scmp.ne.s32.totalorder %s402, %s404
      %p411 = scmp.eq.s32.totalorder %s36, 15
      %p412 = por %p410, %p411
      %p413 = scmp.ne.s32.totalorder %s404, %s405
      %p414 = scmp.eq.s32.totalorder %s36, 0
      %p415 = por %p413, %p414
      %p416 = scmp.ne.s32.totalorder %s404, %s405
      %p417 = scmp.eq.s32.totalorder %s37, 15
      %p418 = por %p416, %p417
      %p420 = scmp.ne.s32.totalorder %s405, %s419
      %p421 = scmp.eq.s32.totalorder %s37, 0
      %p422 = por %p420, %p421
      %s424 = sadd.s32 %s423, 1
      %p427 = scmp.eq.s32.totalorder %s31, 15
      %p428 = scmp.ne.s32.totalorder %s423, %s425
      %p429 = scmp.eq.s32.totalorder %s31, 0
      %p430 = por %p428, %p429
      %p431 = scmp.ne.s32.totalorder %s423, %s425
      %p432 = scmp.eq.s32.totalorder %s36, 15
      %p433 = por %p431, %p432
      %p434 = scmp.ne.s32.totalorder %s425, %s426
      %p435 = scmp.eq.s32.totalorder %s36, 0
      %p436 = por %p434, %p435
      %p437 = scmp.ne.s32.totalorder %s425, %s426
      %p438 = scmp.eq.s32.totalorder %s37, 15
      %p439 = por %p437, %p438
      %p441 = scmp.ne.s32.totalorder %s426, %s440
      %p442 = scmp.eq.s32.totalorder %s37, 0
      %p443 = por %p441, %p442
      %s445 = sadd.s32 %s444, 1
      %p448 = scmp.eq.s32.totalorder %s31, 15
      %p449 = scmp.ne.s32.totalorder %s444, %s446
      %p450 = scmp.eq.s32.totalorder %s31, 0
      %p451 = por %p449, %p450
      %p452 = scmp.ne.s32.totalorder %s444, %s446
      %p453 = scmp.eq.s32.totalorder %s36, 15
      %p454 = por %p452, %p453
      %p455 = scmp.ne.s32.totalorder %s446, %s447
      %p456 = scmp.eq.s32.totalorder %s36, 0
      %p457 = por %p455, %p456
      %p458 = scmp.ne.s32.totalorder %s446, %s447
      %p459 = scmp.eq.s32.totalorder %s37, 15
      %p460 = por %p458, %p459
      %p462 = scmp.ne.s32.totalorder %s447, %s461
      %p463 = scmp.eq.s32.totalorder %s37, 0
      %p464 = por %p462, %p463
      %s466 = sadd.s32 %s465, 1
      %p469 = scmp.eq.s32.totalorder %s31, 15
      %p470 = scmp.ne.s32.totalorder %s465, %s467
      %p471 = scmp.eq.s32.totalorder %s31, 0
      %p472 = por %p470, %p471
      %p473 = scmp.ne.s32.totalorder %s465, %s467
      %p474 = scmp.eq.s32.totalorder %s36, 15
      %p475 = por %p473, %p474
      %p476 = scmp.ne.s32.totalorder %s467, %s468
      %p477 = scmp.eq.s32.totalorder %s36, 0
      %p478 = por %p476, %p477
      %p479 = scmp.ne.s32.totalorder %s467, %s468
      %p480 = scmp.eq.s32.totalorder %s37, 15
      %p481 = por %p479, %p480
      %p483 = scmp.ne.s32.totalorder %s468, %s482
      %p484 = scmp.eq.s32.totalorder %s37, 0
      %p485 = por %p483, %p484
      %s486 = ssub.s32 %s39, %s46
      %s487 = ssub.s32 %s38, %s50
      %s488 = sor.u32 %s486, %s487
      %p489 = scmp.eq.s32.totalorder %s488, 0
      %s491 = sadd.s32 %s490, 1
      %s492 = scalar_select %p489, %s490, %s491
      %p495 = pneg %p489
      %p496 = scmp.eq.s32.totalorder %s31, 15
      %p497 = por %p495, %p496
      %p498 = scmp.ne.s32.totalorder %s490, %s493
      %p499 = scmp.eq.s32.totalorder %s31, 0
      %p500 = por %p498, %p499
      %p501 = scmp.ne.s32.totalorder %s490, %s493
      %p502 = scmp.eq.s32.totalorder %s36, 15
      %p503 = por %p501, %p502
      %p504 = scmp.ne.s32.totalorder %s493, %s494
      %p505 = scmp.eq.s32.totalorder %s36, 0
      %p506 = por %p504, %p505
      %p507 = scmp.ne.s32.totalorder %s493, %s494
      %p508 = scmp.eq.s32.totalorder %s37, 15
      %p509 = por %p507, %p508
      %p511 = scmp.ne.s32.totalorder %s494, %s510
      %p512 = scmp.eq.s32.totalorder %s37, 0
      %p513 = por %p511, %p512
      %p514 = scmp.le.s32.totalorder 1, %s31
      %p515 = scmp.lt.s32.totalorder %s31, 17
      %p516 = pnand %p514, %p515
      %p517 = pneg %p516
      // Predicated region
      $region9: #{tpu_custom_call.1} parent=5 // pred_check
        _
      $region10: #{tpu_custom_call.1} parent=5 // pred_check_branch
        %519 = sbr.rel (%p516) target = $region12
      $region11: #{tpu_custom_call.1} parent=5 // pred_region
        %s520 = ssub.s32 %s31, 1
        // Predicated region
        $region13: #{tpu_custom_call.1} parent=11 // pred_check
          %p521 = pneg %p142
        $region14: #{tpu_custom_call.1} parent=11 // pred_check_branch
          %523 = sbr.rel (%p521) target = $region16
        $region15: #{tpu_custom_call.1} parent=11 // pred_region
          _
        $region16: #{tpu_custom_call.1} parent=11 // pred_fallthru
          _
        // Predicated region
        $region17: #{tpu_custom_call.1} parent=11 // pred_check
          %p524 = pneg %p163
        $region18: #{tpu_custom_call.1} parent=11 // pred_check_branch
          %526 = sbr.rel (%p524) target = $region20
        $region19: #{tpu_custom_call.1} parent=11 // pred_region
          _
        $region20: #{tpu_custom_call.1} parent=11 // pred_fallthru
          _
        // Predicated region
        $region21: #{tpu_custom_call.1} parent=11 // pred_check
          %p527 = pneg %p184
        $region22: #{tpu_custom_call.1} parent=11 // pred_check_branch
          %529 = sbr.rel (%p527) target = $region24
        $region23: #{tpu_custom_call.1} parent=11 // pred_region
          _
        $region24: #{tpu_custom_call.1} parent=11 // pred_fallthru
          _
        // Predicated region
        $region25: #{tpu_custom_call.1} parent=11 // pred_check
          %p530 = pneg %p205
        $region26: #{tpu_custom_call.1} parent=11 // pred_check_branch
          %532 = sbr.rel (%p530) target = $region28
        $region27: #{tpu_custom_call.1} parent=11 // pred_region
          _
        $region28: #{tpu_custom_call.1} parent=11 // pred_fallthru
          _
        // Predicated region
        $region29: #{tpu_custom_call.1} parent=11 // pred_check
          %p533 = pneg %p226
        $region30: #{tpu_custom_call.1} parent=11 // pred_check_branch
          %535 = sbr.rel (%p533) target = $region32
        $region31: #{tpu_custom_call.1} parent=11 // pred_region
          _
        $region32: #{tpu_custom_call.1} parent=11 // pred_fallthru
          _
        // Predicated region
        $region33: #{tpu_custom_call.1} parent=11 // pred_check
          %p536 = pneg %p247
        $region34: #{tpu_custom_call.1} parent=11 // pred_check_branch
          %538 = sbr.rel (%p536) target = $region36
        $region35: #{tpu_custom_call.1} parent=11 // pred_region
          _
        $region36: #{tpu_custom_call.1} parent=11 // pred_fallthru
          _
        // Predicated region
        $region37: #{tpu_custom_call.1} parent=11 // pred_check
          %p539 = pneg %p268
        $region38: #{tpu_custom_call.1} parent=11 // pred_check_branch
          %541 = sbr.rel (%p539) target = $region40
        $region39: #{tpu_custom_call.1} parent=11 // pred_region
          _
        $region40: #{tpu_custom_call.1} parent=11 // pred_fallthru
          _
        // Predicated region
        $region41: #{tpu_custom_call.1} parent=11 // pred_check
          %p542 = pneg %p289
        $region42: #{tpu_custom_call.1} parent=11 // pred_check_branch
          %544 = sbr.rel (%p542) target = $region44
        $region43: #{tpu_custom_call.1} parent=11 // pred_region
          _
        $region44: #{tpu_custom_call.1} parent=11 // pred_fallthru
          _
        // Predicated region
        $region45: #{tpu_custom_call.1} parent=11 // pred_check
          %p545 = pneg %p310
        $region46: #{tpu_custom_call.1} parent=11 // pred_check_branch
          %547 = sbr.rel (%p545) target = $region48
        $region47: #{tpu_custom_call.1} parent=11 // pred_region
          _
        $region48: #{tpu_custom_call.1} parent=11 // pred_fallthru
          _
        // Predicated region
        $region49: #{tpu_custom_call.1} parent=11 // pred_check
          %p548 = pneg %p331
        $region50: #{tpu_custom_call.1} parent=11 // pred_check_branch
          %550 = sbr.rel (%p548) target = $region52
        $region51: #{tpu_custom_call.1} parent=11 // pred_region
          _
        $region52: #{tpu_custom_call.1} parent=11 // pred_fallthru
          _
        // Predicated region
        $region53: #{tpu_custom_call.1} parent=11 // pred_check
          %p551 = pneg %p352
        $region54: #{tpu_custom_call.1} parent=11 // pred_check_branch
          %553 = sbr.rel (%p551) target = $region56
        $region55: #{tpu_custom_call.1} parent=11 // pred_region
          _
        $region56: #{tpu_custom_call.1} parent=11 // pred_fallthru
          _
        // Predicated region
        $region57: #{tpu_custom_call.1} parent=11 // pred_check
          %p554 = pneg %p373
        $region58: #{tpu_custom_call.1} parent=11 // pred_check_branch
          %556 = sbr.rel (%p554) target = $region60
        $region59: #{tpu_custom_call.1} parent=11 // pred_region
          _
        $region60: #{tpu_custom_call.1} parent=11 // pred_fallthru
          _
        // Predicated region
        $region61: #{tpu_custom_call.1} parent=11 // pred_check
          %p557 = pneg %p394
        $region62: #{tpu_custom_call.1} parent=11 // pred_check_branch
          %559 = sbr.rel (%p557) target = $region64
        $region63: #{tpu_custom_call.1} parent=11 // pred_region
          _
        $region64: #{tpu_custom_call.1} parent=11 // pred_fallthru
          _
        // Predicated region
        $region65: #{tpu_custom_call.1} parent=11 // pred_check
          %p560 = pneg %p415
        $region66: #{tpu_custom_call.1} parent=11 // pred_check_branch
          %562 = sbr.rel (%p560) target = $region68
        $region67: #{tpu_custom_call.1} parent=11 // pred_region
          _
        $region68: #{tpu_custom_call.1} parent=11 // pred_fallthru
          _
        // Predicated region
        $region69: #{tpu_custom_call.1} parent=11 // pred_check
          %p563 = pneg %p436
        $region70: #{tpu_custom_call.1} parent=11 // pred_check_branch
          %565 = sbr.rel (%p563) target = $region72
        $region71: #{tpu_custom_call.1} parent=11 // pred_region
          _
        $region72: #{tpu_custom_call.1} parent=11 // pred_fallthru
          _
        // Predicated region
        $region73: #{tpu_custom_call.1} parent=11 // pred_check
          %p566 = pneg %p457
        $region74: #{tpu_custom_call.1} parent=11 // pred_check_branch
          %568 = sbr.rel (%p566) target = $region76
        $region75: #{tpu_custom_call.1} parent=11 // pred_region
          _
        $region76: #{tpu_custom_call.1} parent=11 // pred_fallthru
          _
        // Predicated region
        $region77: #{tpu_custom_call.1} parent=11 // pred_check
          %p569 = pneg %p478
        $region78: #{tpu_custom_call.1} parent=11 // pred_check_branch
          %571 = sbr.rel (%p569) target = $region80
        $region79: #{tpu_custom_call.1} parent=11 // pred_region
          _
        $region80: #{tpu_custom_call.1} parent=11 // pred_fallthru
          _
      $region12: #{tpu_custom_call.1} parent=5 // pred_fallthru
        _
      %p572 = scmp.lt.s32.totalorder %s31, 16
      // Predicated region
      $region81: #{tpu_custom_call.1} parent=5 // pred_check
        %p573 = pneg %p572
      $region82: #{tpu_custom_call.1} parent=5 // pred_check_branch
        %575 = sbr.rel (%p573) target = $region84
      $region83: #{tpu_custom_call.1} parent=5 // pred_region
        // Predicated region
        $region85: #{tpu_custom_call.1} parent=83 // pred_check
          %p576 = pneg %p63
        $region86: #{tpu_custom_call.1} parent=83 // pred_check_branch
          %578 = sbr.rel (%p576) target = $region88
        $region87: #{tpu_custom_call.1} parent=83 // pred_region
          %s579 = sand.u32 %s53, 1
          %s580 = sand.u32 %s53, 1
          %s581 = smul.addr %s580, 32
          %s582 = scalar_lea.vmem [#allocation6], %s581
          %s583 = smul.u32 2, %s38
          %s584 = smul.addr %s583, 8
          %s585 = scalar_lea.vmem %s0, %s584
          // Predicated region
          $region89: #{tpu_custom_call.1} parent=87 // pred_check
            _
          $region90: #{tpu_custom_call.1} parent=87 // pred_check_branch
            %587 = sbr.rel (0) target = $region92
          $region91: #{tpu_custom_call.1} parent=87 // pred_region
            // Predicated region
            $region93: #{tpu_custom_call.1} parent=91 // pred_check
              _
            $region94: #{tpu_custom_call.1} parent=91 // pred_check_branch
              %589 = sbr.rel (0) target = $region96
            $region95: #{tpu_custom_call.1} parent=91 // pred_region
              loop: start=0, step=1, limit=1
              $region97: #{tpu_custom_call.1} parent=95 // loop_pre_header
                _
              $region98: #{tpu_custom_call.1} parent=95 // loop_header
                %s591 = sphi 0, %s595
                %p592 = scmp.ge.s32.totalorder %s591, 1
                %s596 = sphi %s585, %s585
                %s597 = sphi %s582, %s582
              $region99: #{tpu_custom_call.1} parent=95 // loop_header_branch
                %594 = sbr.rel (%p592) target = $region103
              $region100: #{tpu_custom_call.1} parent=95 // loop_body
                %v598 = vld [vmem:[%s596] sm:$0xff]
                %599 = vst [vmem:[%s597] sm:$0xff] %v598
                %v600 = vld [vmem:[%s596 + $0x8] sm:$0xff]
                %601 = vst [vmem:[%s597 + $0x8] sm:$0xff] %v600
                %v602 = vld [vmem:[%s596 + $0x20] sm:$0xff]
                %603 = vst [vmem:[%s597 + $0x10] sm:$0xff] %v602
                %v604 = vld [vmem:[%s596 + $0x28] sm:$0xff]
                %605 = vst [vmem:[%s597 + $0x18] sm:$0xff] %v604
              $region101: #{tpu_custom_call.1} parent=95 // loop_footer
                %s595 = sadd.s32 1, %s591
              $region102: #{tpu_custom_call.1} parent=95 // loop_footer_branch
                %590 = sbr.rel target = $region98
              $region103: #{tpu_custom_call.1} parent=95 // loop_exit
                _
            $region96: #{tpu_custom_call.1} parent=91 // pred_fallthru
              _
            // Predicated region
            $region104: #{tpu_custom_call.1} parent=91 // pred_check
              _
            $region105: #{tpu_custom_call.1} parent=91 // pred_check_branch
              %607 = sbr.rel target = $region107
            $region106: #{tpu_custom_call.1} parent=91 // pred_region
              _
            $region107: #{tpu_custom_call.1} parent=91 // pred_fallthru
              _
          $region92: #{tpu_custom_call.1} parent=87 // pred_fallthru
            _
          %608 = vnop
        $region88: #{tpu_custom_call.1} parent=83 // pred_fallthru
          _
        // Predicated region
        $region108: #{tpu_custom_call.1} parent=83 // pred_check
          %p609 = pneg %p89
        $region109: #{tpu_custom_call.1} parent=83 // pred_check_branch
          %611 = sbr.rel (%p609) target = $region111
        $region110: #{tpu_custom_call.1} parent=83 // pred_region
          %s612 = smul.u32 2, %s38
          %p613 = scmp.lt.s32.totalorder %s612, 3
          %s614 = scalar_select %p613, %s612, 3
          %s615 = smul.addr %s614, 8
          %s616 = scalar_lea.vmem %s1, %s615
          %s617 = smul.u32 2, %s38
        $region111: #{tpu_custom_call.1} parent=83 // pred_fallthru
          _
        // Predicated region
        $region112: #{tpu_custom_call.1} parent=83 // pred_check
          %p618 = pneg %p115
        $region113: #{tpu_custom_call.1} parent=83 // pred_check_branch
          %620 = sbr.rel (%p618) target = $region115
        $region114: #{tpu_custom_call.1} parent=83 // pred_region
          %s621 = smul.u32 2, %s38
          %p622 = scmp.lt.s32.totalorder %s621, 3
          %s623 = scalar_select %p622, %s621, 3
          %s624 = smul.addr %s623, 8
          %s625 = scalar_lea.vmem %s2, %s624
          %s626 = smul.u32 2, %s38
        $region115: #{tpu_custom_call.1} parent=83 // pred_fallthru
          _
      $region84: #{tpu_custom_call.1} parent=5 // pred_fallthru
        _
      %p627 = scmp.le.s32.totalorder 1, %s31
      %p628 = scmp.lt.s32.totalorder %s31, 17
      %p629 = pnand %p627, %p628
      %p630 = pneg %p629
      // Predicated region
      $region116: #{tpu_custom_call.1} parent=5 // pred_check
        _
      $region117: #{tpu_custom_call.1} parent=5 // pred_check_branch
        %632 = sbr.rel (%p629) target = $region119
      $region118: #{tpu_custom_call.1} parent=5 // pred_region
        %s633 = ssub.s32 %s31, 1
        %s634 = sand.u32 %s56, 1
        %s635 = sand.u32 %s56, 1
        %s636 = smul.addr %s635, 32
        %s637 = scalar_lea.vmem [#allocation6], %s636
        // Predicated region
        $region120: #{tpu_custom_call.1} parent=118 // pred_check
          %p638 = pneg %p69
        $region121: #{tpu_custom_call.1} parent=118 // pred_check_branch
          %640 = sbr.rel (%p638) target = $region123
        $region122: #{tpu_custom_call.1} parent=118 // pred_region
          _
        $region123: #{tpu_custom_call.1} parent=118 // pred_fallthru
          _
        %s641 = sand.u32 %s56, 1
        %s642 = sand.u32 %s56, 1
        %s643 = smul.addr %s642, 32
        %s644 = scalar_lea.vmem [#allocation6], %s643
        %p645 = pneg %p69
        %p646 = pneg %p66
        %s647 = smul.u32 2, %s40
        %p648 = scmp.lt.s32.totalorder %s647, 3
        %s649 = scalar_select %p648, %s647, 3
        %s650 = smul.addr %s649, 8
        %s651 = scalar_lea.vmem %s1, %s650
        %p652 = pneg %p95
        %p653 = pneg %p92
        %s654 = smul.u32 2, %s40
        %p655 = scmp.lt.s32.totalorder %s654, 3
        %s656 = scalar_select %p655, %s654, 3
        %s657 = smul.addr %s656, 8
        %s658 = scalar_lea.vmem %s2, %s657
        %p659 = pneg %p121
        %p660 = pneg %p118
        %p661 = pneg %p142
        %p662 = pneg %p139
        %p663 = pneg %p163
        %p664 = pneg %p160
        %p665 = pneg %p184
        %p666 = pneg %p181
        %p667 = pneg %p205
        %p668 = pneg %p202
        %p669 = pneg %p226
        %p670 = pneg %p223
        %p671 = pneg %p247
        %p672 = pneg %p244
        %p673 = pneg %p268
        %p674 = pneg %p265
        %p675 = pneg %p289
        %p676 = pneg %p286
        %p677 = pneg %p310
        %p678 = pneg %p307
        %p679 = pneg %p331
        %p680 = pneg %p328
        %p681 = pneg %p352
        %p682 = pneg %p349
        %p683 = pneg %p373
        %p684 = pneg %p370
        %p685 = pneg %p394
        %p686 = pneg %p391
        %p687 = pneg %p415
        %p688 = pneg %p412
        %p689 = pneg %p436
        %p690 = pneg %p433
        %p691 = pneg %p457
        %p692 = pneg %p454
        %p693 = pneg %p478
        %p694 = pneg %p475
        %p695 = pneg %p506
        %p696 = pneg %p503
        %s697 = sand.u32 %s493, 1
        %s698 = scalar_lea.sflag [#allocation8], %s697
        %s699 = sand.u32 %s493, 1
        %s700 = smul.addr %s699, 2
        %s701 = scalar_lea.vmem [#allocation7], %s700
        %s702 = smul.u32 2, %s40
        %s703 = smul.u32 2, %s40
        %p704 = scmp.lt.s32.totalorder %s703, 3
        %s705 = scalar_select %p704, %s703, 3
        %s706 = smul.addr %s705, 8
        %s707 = scalar_lea.vmem %s1, %s706
        %s708 = smul.u32 2, %s40
        %s709 = smul.u32 2, %s40
        %p710 = scmp.lt.s32.totalorder %s709, 3
        %s711 = scalar_select %p710, %s709, 3
        %s712 = smul.addr %s711, 8
        %s713 = scalar_lea.vmem %s2, %s712
        %s714 = smul.u32 2, %s40
        %s715 = smul.u32 2, %s40
        %p716 = scmp.eq.s32.totalorder %s41, 0
        // Predicated region
        $region124: #{tpu_custom_call.1} parent=118 // pred_check
          %p717 = pneg %p716
        $region125: #{tpu_custom_call.1} parent=118 // pred_check_branch
          %719 = sbr.rel (%p717) target = $region127
        $region126: #{tpu_custom_call.1} parent=118 // pred_region
          %v720 = vld [vmem:[%s637] sm:$0xff]
          %v721 = vld [vmem:[%s637 + $0x8] sm:$0xff]
          %v722 = vld [vmem:[%s637 + $0x10] sm:$0xff]
          %v723 = vld [vmem:[%s637 + $0x18] sm:$0xff]
          %724 = vst [vmem:[#allocation2] sm:$0xff] %v720
          %725 = vst [vmem:[#allocation2 + $0x8] sm:$0xff] %v721
          %726 = vst [vmem:[#allocation2 + $0x10] sm:$0xff] %v722
          %727 = vst [vmem:[#allocation2 + $0x18] sm:$0xff] %v723
          %v728 = vld [vmem:[%s707] sm:$0xff]
          %v729 = vld [vmem:[%s707 + $0x8] sm:$0xff]
          %730 = vst [vmem:[#allocation3] sm:$0xff] %v728
          %731 = vst [vmem:[#allocation3 + $0x8] sm:$0xff] %v729
          %v732 = vld [vmem:[%s713] sm:$0xff]
          %v733 = vld [vmem:[%s713 + $0x8] sm:$0xff]
          %734 = vst [vmem:[#allocation4] sm:$0xff] %v732
          %735 = vst [vmem:[#allocation4 + $0x8] sm:$0xff] %v733
        $region127: #{tpu_custom_call.1} parent=118 // pred_fallthru
          _
        %v736 = vld [vmem:[#allocation2] sm:$0xff]
        %v737 = vld [vmem:[#allocation2 + $0x8] sm:$0xff]
        %v738 = vld [vmem:[#allocation2 + $0x10] sm:$0xff]
        %v739 = vld [vmem:[#allocation2 + $0x18] sm:$0xff]
        %v740 = vld [vmem:[%s5] sm:$0xff]
        %v741 = vld [vmem:[%s5 + $0x8] sm:$0xff]
        %v742 = vld [vmem:[%s5 + $0x10] sm:$0xff]
        %v743 = vld [vmem:[%s5 + $0x18] sm:$0xff]
        %v744 = vld [vmem:[%s5 + $0x20] sm:$0xff]
        %v745 = vld [vmem:[%s5 + $0x28] sm:$0xff]
        %v746 = vld [vmem:[%s3] sm:$0xff]
        %v747 = vld [vmem:[%s3 + $0x8] sm:$0xff]
        %v748 = vld [vmem:[%s3 + $0x10] sm:$0xff]
        %v749 = vld [vmem:[%s3 + $0x18] sm:$0xff]
        %vm750 = vcmask 130048
        %v752 = vsel %vm750, %v746, 0
        %v755 = vsel %vm750, %v747, 0
        %v758 = vsel %vm750, %v748, 0
        %v761 = vsel %vm750, %v749, 0
        %763 = vmatpush.msra.mxu0 0.0
        %764 = vmatpush.msra.mxu0 0.0
        %765 = vmatpush.msra.mxu0 0.0
        %766 = vmatpush.msra.mxu0 0.0
        %767 = vmatpush.msra.mxu0 0.0
        %768 = vmatpush.msra.mxu0 0.0
        %769 = vmatpush.msra.mxu0 0.0
        %770 = vmatpush.msra.mxu0 0.0
        %771 = vmatpush.msra.mxu0 0.0
        %772 = vmatpush.msra.mxu0 0.0
        %773 = vmatpush.msra.mxu0 0.0
        %774 = vmatpush.msra.mxu0 0.0
        %775 = vmatpush.msra.mxu0 0.0
        %776 = vmatpush.msra.mxu0 0.0
        %777 = vmatpush.msra.mxu0 %v738
        %778 = vmatpush.msra.mxu0 %v736
        %779 = vmatmul.f32.gmra.mxu0 %v752
        %v780 = vpop.f32.mrf.mxu0
        %v781 = vadd.f32 0.0, %v780
        %782 = vmatmul.f32.gmra.mxu0 %v755
        %v783 = vpop.f32.mrf.mxu0
        %v784 = vadd.f32 0.0, %v783
        %785 = vmatmul.f32.gmra.mxu0 %v758
        %v786 = vpop.f32.mrf.mxu0
        %v787 = vadd.f32 0.0, %v786
        %788 = vmatmul.f32.gmra.mxu0 %v761
        %v789 = vpop.f32.mrf.mxu0
        %v790 = vadd.f32 0.0, %v789
        %791 = vdwg.mxu0
        %792 = vmatpush.msra.mxu0 0.0
        %793 = vmatpush.msra.mxu0 0.0
        %794 = vmatpush.msra.mxu0 0.0
        %795 = vmatpush.msra.mxu0 0.0
        %796 = vmatpush.msra.mxu0 0.0
        %797 = vmatpush.msra.mxu0 0.0
        %798 = vmatpush.msra.mxu0 0.0
        %799 = vmatpush.msra.mxu0 0.0
        %800 = vmatpush.msra.mxu0 0.0
        %801 = vmatpush.msra.mxu0 0.0
        %802 = vmatpush.msra.mxu0 0.0
        %803 = vmatpush.msra.mxu0 0.0
        %804 = vmatpush.msra.mxu0 0.0
        %805 = vmatpush.msra.mxu0 0.0
        %806 = vmatpush.msra.mxu0 %v739
        %807 = vmatpush.msra.mxu0 %v737
        %808 = vmatmul.f32.gmra.mxu0 %v752
        %v809 = vpop.f32.mrf.mxu0
        %v810 = vadd.f32 0.0, %v809
        %811 = vmatmul.f32.gmra.mxu0 %v755
        %v812 = vpop.f32.mrf.mxu0
        %v813 = vadd.f32 0.0, %v812
        %814 = vmatmul.f32.gmra.mxu0 %v758
        %v815 = vpop.f32.mrf.mxu0
        %v816 = vadd.f32 0.0, %v815
        %817 = vmatmul.f32.gmra.mxu0 %v761
        %v818 = vpop.f32.mrf.mxu0
        %v819 = vadd.f32 0.0, %v818
        %820 = vdwg.mxu0
        %822 = vset.pattern.permute.xlu0 0
        %823 = vperm.xlu0 %822, %v740
        %v824 = vpop.permute.xlu0 %823
        %827 = vset.pattern.permute.xlu0 0
        %828 = vperm.xlu0 %827, %v741
        %v829 = vpop.permute.xlu0 %828
        %v831 = vadd.f32 %v781, %v824
        %v832 = vadd.f32 %v810, %v824
        %v833 = vadd.f32 %v784, %v829
        %v834 = vadd.f32 %v813, %v829
        %836 = vset.pattern.permute.xlu0 0
        %837 = vperm.xlu0 %836, %v742
        %v838 = vpop.permute.xlu0 %837
        %841 = vset.pattern.permute.xlu0 0
        %842 = vperm.xlu0 %841, %v743
        %v843 = vpop.permute.xlu0 %842
        %v845 = vadd.f32 %v787, %v838
        %v846 = vadd.f32 %v816, %v838
        %v847 = vadd.f32 %v790, %v843
        %v848 = vadd.f32 %v819, %v843
        %v849 = vxor.u32 %v831, 2147483648
        %v850 = vxor.u32 %v832, 2147483648
        %v851 = vxor.u32 %v833, 2147483648
        %v852 = vxor.u32 %v834, 2147483648
        %v853 = vmul.f32 %v849, 1.442695
        %v854 = vpow.pop %v853
        %v855 = vmul.f32 %v850, 1.442695
        %v856 = vpow.pop %v855
        %v857 = vmul.f32 %v851, 1.442695
        %v858 = vpow.pop %v857
        %v859 = vmul.f32 %v852, 1.442695
        %v860 = vpow.pop %v859
        %v861 = vadd.f32 %v854, 1.0
        %v862 = vadd.f32 %v856, 1.0
        %v863 = vadd.f32 %v858, 1.0
        %v864 = vadd.f32 %v860, 1.0
        %v865 = vrcp.pop %v861
        %v866 = vmul.f32 %v861, %v865
        %v867 = vsub.f32 1.0, %v866
        %v868 = vmul.f32 %v865, %v867
        %v869 = vadd.f32 %v865, %v868
        %vm870 = vweird.f32 %v861
        %vm871 = vweird.f32 %v865
        %vm872 = vmor %vm870, %vm871
        %v873 = vsel %vm872, %v865, %v869
        %v874 = vand.u32 2147483647, %v861
        %vm875 = vcmp.eq.f32.partialorder %v874, 8.507059e+37
        %v876 = vand.u32 %v861, 2147483648
        %v877 = vor.u32 1.1754944e-38, %v876
        %v878 = vsel %vm875, %v877, %v873
        %v879 = vmul.f32 1.0, %v878
        %v880 = vrcp.pop %v862
        %v881 = vmul.f32 %v862, %v880
        %v882 = vsub.f32 1.0, %v881
        %v883 = vmul.f32 %v880, %v882
        %v884 = vadd.f32 %v880, %v883
        %vm885 = vweird.f32 %v862
        %vm886 = vweird.f32 %v880
        %vm887 = vmor %vm885, %vm886
        %v888 = vsel %vm887, %v880, %v884
        %v889 = vand.u32 2147483647, %v862
        %vm890 = vcmp.eq.f32.partialorder %v889, 8.507059e+37
        %v891 = vand.u32 %v862, 2147483648
        %v892 = vor.u32 1.1754944e-38, %v891
        %v893 = vsel %vm890, %v892, %v888
        %v894 = vmul.f32 1.0, %v893
        %v895 = vrcp.pop %v863
        %v896 = vmul.f32 %v863, %v895
        %v897 = vsub.f32 1.0, %v896
        %v898 = vmul.f32 %v895, %v897
        %v899 = vadd.f32 %v895, %v898
        %vm900 = vweird.f32 %v863
        %vm901 = vweird.f32 %v895
        %vm902 = vmor %vm900, %vm901
        %v903 = vsel %vm902, %v895, %v899
        %v904 = vand.u32 2147483647, %v863
        %vm905 = vcmp.eq.f32.partialorder %v904, 8.507059e+37
        %v906 = vand.u32 %v863, 2147483648
        %v907 = vor.u32 1.1754944e-38, %v906
        %v908 = vsel %vm905, %v907, %v903
        %v909 = vmul.f32 1.0, %v908
        %v910 = vrcp.pop %v864
        %v911 = vmul.f32 %v864, %v910
        %v912 = vsub.f32 1.0, %v911
        %v913 = vmul.f32 %v910, %v912
        %v914 = vadd.f32 %v910, %v913
        %vm915 = vweird.f32 %v864
        %vm916 = vweird.f32 %v910
        %vm917 = vmor %vm915, %vm916
        %v918 = vsel %vm917, %v910, %v914
        %v919 = vand.u32 2147483647, %v864
        %vm920 = vcmp.eq.f32.partialorder %v919, 8.507059e+37
        %v921 = vand.u32 %v864, 2147483648
        %v922 = vor.u32 1.1754944e-38, %v921
        %v923 = vsel %vm920, %v922, %v918
        %v924 = vmul.f32 1.0, %v923
        %v925 = vxor.u32 %v845, 2147483648
        %v926 = vxor.u32 %v846, 2147483648
        %v927 = vxor.u32 %v847, 2147483648
        %v928 = vxor.u32 %v848, 2147483648
        %v929 = vmul.f32 %v925, 1.442695
        %v930 = vpow.pop %v929
        %v931 = vmul.f32 %v926, 1.442695
        %v932 = vpow.pop %v931
        %v933 = vmul.f32 %v927, 1.442695
        %v934 = vpow.pop %v933
        %v935 = vmul.f32 %v928, 1.442695
        %v936 = vpow.pop %v935
        %v937 = vadd.f32 %v930, 1.0
        %v938 = vadd.f32 %v932, 1.0
        %v939 = vadd.f32 %v934, 1.0
        %v940 = vadd.f32 %v936, 1.0
        %v941 = vrcp.pop %v937
        %v942 = vmul.f32 %v937, %v941
        %v943 = vsub.f32 1.0, %v942
        %v944 = vmul.f32 %v941, %v943
        %v945 = vadd.f32 %v941, %v944
        %vm946 = vweird.f32 %v937
        %vm947 = vweird.f32 %v941
        %vm948 = vmor %vm946, %vm947
        %v949 = vsel %vm948, %v941, %v945
        %v950 = vand.u32 2147483647, %v937
        %vm951 = vcmp.eq.f32.partialorder %v950, 8.507059e+37
        %v952 = vand.u32 %v937, 2147483648
        %v953 = vor.u32 1.1754944e-38, %v952
        %v954 = vsel %vm951, %v953, %v949
        %v955 = vmul.f32 1.0, %v954
        %v956 = vrcp.pop %v938
        %v957 = vmul.f32 %v938, %v956
        %v958 = vsub.f32 1.0, %v957
        %v959 = vmul.f32 %v956, %v958
        %v960 = vadd.f32 %v956, %v959
        %vm961 = vweird.f32 %v938
        %vm962 = vweird.f32 %v956
        %vm963 = vmor %vm961, %vm962
        %v964 = vsel %vm963, %v956, %v960
        %v965 = vand.u32 2147483647, %v938
        %vm966 = vcmp.eq.f32.partialorder %v965, 8.507059e+37
        %v967 = vand.u32 %v938, 2147483648
        %v968 = vor.u32 1.1754944e-38, %v967
        %v969 = vsel %vm966, %v968, %v964
        %v970 = vmul.f32 1.0, %v969
        %v971 = vrcp.pop %v939
        %v972 = vmul.f32 %v939, %v971
        %v973 = vsub.f32 1.0, %v972
        %v974 = vmul.f32 %v971, %v973
        %v975 = vadd.f32 %v971, %v974
        %vm976 = vweird.f32 %v939
        %vm977 = vweird.f32 %v971
        %vm978 = vmor %vm976, %vm977
        %v979 = vsel %vm978, %v971, %v975
        %v980 = vand.u32 2147483647, %v939
        %vm981 = vcmp.eq.f32.partialorder %v980, 8.507059e+37
        %v982 = vand.u32 %v939, 2147483648
        %v983 = vor.u32 1.1754944e-38, %v982
        %v984 = vsel %vm981, %v983, %v979
        %v985 = vmul.f32 1.0, %v984
        %v986 = vrcp.pop %v940
        %v987 = vmul.f32 %v940, %v986
        %v988 = vsub.f32 1.0, %v987
        %v989 = vmul.f32 %v986, %v988
        %v990 = vadd.f32 %v986, %v989
        %vm991 = vweird.f32 %v940
        %vm992 = vweird.f32 %v986
        %vm993 = vmor %vm991, %vm992
        %v994 = vsel %vm993, %v986, %v990
        %v995 = vand.u32 2147483647, %v940
        %vm996 = vcmp.eq.f32.partialorder %v995, 8.507059e+37
        %v997 = vand.u32 %v940, 2147483648
        %v998 = vor.u32 1.1754944e-38, %v997
        %v999 = vsel %vm996, %v998, %v994
        %v1000 = vmul.f32 1.0, %v999
        %v1001 = vld [vmem:[%s4] sm:$0xff]
        %v1002 = vld [vmem:[%s4 + $0x8] sm:$0xff]
        %v1003 = vmul.f32 %v955, %v736
        %v1004 = vmul.f32 %v970, %v737
        %v1005 = vmul.f32 %v985, %v738
        %v1006 = vmul.f32 %v1000, %v739
        %v1008 = vsel %vm750, %v1001, 0
        %v1011 = vsel %vm750, %v1002, 0
        %1013 = vmatpush.msra.mxu0 0.0
        %1014 = vmatpush.msra.mxu0 0.0
        %1015 = vmatpush.msra.mxu0 0.0
        %1016 = vmatpush.msra.mxu0 0.0
        %1017 = vmatpush.msra.mxu0 0.0
        %1018 = vmatpush.msra.mxu0 0.0
        %1019 = vmatpush.msra.mxu0 0.0
        %1020 = vmatpush.msra.mxu0 0.0
        %1021 = vmatpush.msra.mxu0 0.0
        %1022 = vmatpush.msra.mxu0 0.0
        %1023 = vmatpush.msra.mxu0 0.0
        %1024 = vmatpush.msra.mxu0 0.0
        %1025 = vmatpush.msra.mxu0 0.0
        %1026 = vmatpush.msra.mxu0 0.0
        %1027 = vmatpush.msra.mxu0 %v1005
        %1028 = vmatpush.msra.mxu0 %v1003
        %1029 = vmatmul.f32.gmra.mxu0 %v1008
        %v1030 = vpop.f32.mrf.mxu0
        %v1031 = vadd.f32 0.0, %v1030
        %1032 = vmatmul.f32.gmra.mxu0 %v1011
        %v1033 = vpop.f32.mrf.mxu0
        %v1034 = vadd.f32 0.0, %v1033
        %1035 = vdwg.mxu0
        %1036 = vmatpush.msra.mxu0 0.0
        %1037 = vmatpush.msra.mxu0 0.0
        %1038 = vmatpush.msra.mxu0 0.0
        %1039 = vmatpush.msra.mxu0 0.0
        %1040 = vmatpush.msra.mxu0 0.0
        %1041 = vmatpush.msra.mxu0 0.0
        %1042 = vmatpush.msra.mxu0 0.0
        %1043 = vmatpush.msra.mxu0 0.0
        %1044 = vmatpush.msra.mxu0 0.0
        %1045 = vmatpush.msra.mxu0 0.0
        %1046 = vmatpush.msra.mxu0 0.0
        %1047 = vmatpush.msra.mxu0 0.0
        %1048 = vmatpush.msra.mxu0 0.0
        %1049 = vmatpush.msra.mxu0 0.0
        %1050 = vmatpush.msra.mxu0 %v1006
        %1051 = vmatpush.msra.mxu0 %v1004
        %1052 = vmatmul.f32.gmra.mxu0 %v1008
        %v1053 = vpop.f32.mrf.mxu0
        %v1054 = vadd.f32 0.0, %v1053
        %1055 = vmatmul.f32.gmra.mxu0 %v1011
        %v1056 = vpop.f32.mrf.mxu0
        %v1057 = vadd.f32 0.0, %v1056
        %1058 = vdwg.mxu0
        %1060 = vset.pattern.permute.xlu0 0
        %1061 = vperm.xlu0 %1060, %v744
        %v1062 = vpop.permute.xlu0 %1061
        %1065 = vset.pattern.permute.xlu0 0
        %1066 = vperm.xlu0 %1065, %v745
        %v1067 = vpop.permute.xlu0 %1066
        %v1069 = vadd.f32 %v1062, %v1031
        %v1070 = vadd.f32 %v1062, %v1054
        %v1071 = vadd.f32 %v1067, %v1034
        %v1072 = vadd.f32 %v1067, %v1057
        %v1073 = vtanh.pop %v1069
        %v1074 = vtanh.pop %v1070
        %v1075 = vtanh.pop %v1071
        %v1076 = vtanh.pop %v1072
        %v1077 = vsub.f32 1.0, %v879
        %v1078 = vsub.f32 1.0, %v894
        %v1079 = vsub.f32 1.0, %v909
        %v1080 = vsub.f32 1.0, %v924
        %v1081 = vmul.f32 %v1077, %v1073
        %v1082 = vmul.f32 %v1078, %v1074
        %v1083 = vmul.f32 %v1079, %v1075
        %v1084 = vmul.f32 %v1080, %v1076
        %v1085 = vmul.f32 %v879, %v736
        %v1086 = vmul.f32 %v894, %v737
        %v1087 = vmul.f32 %v909, %v738
        %v1088 = vmul.f32 %v924, %v739
        %v1089 = vadd.f32 %v1081, %v1085
        %v1090 = vadd.f32 %v1082, %v1086
        %v1091 = vadd.f32 %v1083, %v1087
        %v1092 = vadd.f32 %v1084, %v1088
        %1093 = vst [vmem:[#allocation2] sm:$0xff] %v1089
        %1094 = vst [vmem:[#allocation2 + $0x8] sm:$0xff] %v1090
        %1095 = vst [vmem:[#allocation2 + $0x10] sm:$0xff] %v1091
        %1096 = vst [vmem:[#allocation2 + $0x18] sm:$0xff] %v1092
        %v1097 = vld [vmem:[%s6] sm:$0xff]
        %v1098 = vld [vmem:[%s7] sm:$0xff]
        %1100 = vset.pattern.permute.xlu0 0
        %1101 = vperm.xlu0 %1100, %v1098
        %v1102 = vpop.permute.xlu0 %1101
        %v1105 = vsel %vm750, %v1097, 0
        %1107 = vmatpush.msra.mxu0 0.0
        %1108 = vmatpush.msra.mxu0 0.0
        %1109 = vmatpush.msra.mxu0 0.0
        %1110 = vmatpush.msra.mxu0 0.0
        %1111 = vmatpush.msra.mxu0 0.0
        %1112 = vmatpush.msra.mxu0 0.0
        %1113 = vmatpush.msra.mxu0 0.0
        %1114 = vmatpush.msra.mxu0 0.0
        %1115 = vmatpush.msra.mxu0 0.0
        %1116 = vmatpush.msra.mxu0 0.0
        %1117 = vmatpush.msra.mxu0 0.0
        %1118 = vmatpush.msra.mxu0 0.0
        %1119 = vmatpush.msra.mxu0 0.0
        %1120 = vmatpush.msra.mxu0 0.0
        %1121 = vmatpush.msra.mxu0 %v1091
        %1122 = vmatpush.msra.mxu0 %v1089
        %1123 = vmatmul.f32.gmra.mxu0 %v1105
        %v1124 = vpop.f32.mrf.mxu0
        %v1125 = vadd.f32 %v1102, %v1124
        %1126 = vdwg.mxu0
        %1127 = vmatpush.msra.mxu0 0.0
        %1128 = vmatpush.msra.mxu0 0.0
        %1129 = vmatpush.msra.mxu0 0.0
        %1130 = vmatpush.msra.mxu0 0.0
        %1131 = vmatpush.msra.mxu0 0.0
        %1132 = vmatpush.msra.mxu0 0.0
        %1133 = vmatpush.msra.mxu0 0.0
        %1134 = vmatpush.msra.mxu0 0.0
        %1135 = vmatpush.msra.mxu0 0.0
        %1136 = vmatpush.msra.mxu0 0.0
        %1137 = vmatpush.msra.mxu0 0.0
        %1138 = vmatpush.msra.mxu0 0.0
        %1139 = vmatpush.msra.mxu0 0.0
        %1140 = vmatpush.msra.mxu0 0.0
        %1141 = vmatpush.msra.mxu0 %v1092
        %1142 = vmatpush.msra.mxu0 %v1090
        %1143 = vmatmul.f32.gmra.mxu0 %v1105
        %v1144 = vpop.f32.mrf.mxu0
        %v1145 = vadd.f32 %v1102, %v1144
        %1146 = vdwg.mxu0
        %vm1147 = vcmp.ge.f32.partialorder %v1125, 0.0
        %vm1148 = vcmp.ge.f32.partialorder %v1145, 0.0
        %v1149 = vmul.f32 %v1125, 0.2
        %v1150 = vmul.f32 %v1145, 0.2
        %v1151 = vsel %vm1147, %v1125, %v1149
        %v1152 = vsel %vm1148, %v1145, %v1150
        %v1153 = vld [vmem:[#allocation3] sm:$0xff]
        %v1154 = vld [vmem:[#allocation3 + $0x8] sm:$0xff]
        %v1155 = vld [vmem:[%s11] sm:$0xff]
        %v1156 = vld [vmem:[%s11 + $0x8] sm:$0xff]
        %v1157 = vld [vmem:[%s11 + $0x10] sm:$0xff]
        %v1158 = vld [vmem:[%s9] sm:$0xff]
        %v1159 = vld [vmem:[%s9 + $0x8] sm:$0xff]
        %vm1160 = vcmask 64512
        %v1162 = vsel %vm1160, %v1158, 0
        %v1165 = vsel %vm1160, %v1159, 0
        %1167 = vmatpush.msra.mxu0 0.0
        %1168 = vmatpush.msra.mxu0 0.0
        %1169 = vmatpush.msra.mxu0 0.0
        %1170 = vmatpush.msra.mxu0 0.0
        %1171 = vmatpush.msra.mxu0 0.0
        %1172 = vmatpush.msra.mxu0 0.0
        %1173 = vmatpush.msra.mxu0 0.0
        %1174 = vmatpush.msra.mxu0 0.0
        %1175 = vmatpush.msra.mxu0 0.0
        %1176 = vmatpush.msra.mxu0 0.0
        %1177 = vmatpush.msra.mxu0 0.0
        %1178 = vmatpush.msra.mxu0 0.0
        %1179 = vmatpush.msra.mxu0 0.0
        %1180 = vmatpush.msra.mxu0 0.0
        %1181 = vmatpush.msra.mxu0 0.0
        %1182 = vmatpush.msra.mxu0 %v1153
        %1183 = vmatmul.f32.gmra.mxu0 %v1162
        %v1184 = vpop.f32.mrf.mxu0
        %v1185 = vadd.f32 0.0, %v1184
        %1186 = vmatmul.f32.gmra.mxu0 %v1165
        %v1187 = vpop.f32.mrf.mxu0
        %v1188 = vadd.f32 0.0, %v1187
        %1189 = vdwg.mxu0
        %1190 = vmatpush.msra.mxu0 0.0
        %1191 = vmatpush.msra.mxu0 0.0
        %1192 = vmatpush.msra.mxu0 0.0
        %1193 = vmatpush.msra.mxu0 0.0
        %1194 = vmatpush.msra.mxu0 0.0
        %1195 = vmatpush.msra.mxu0 0.0
        %1196 = vmatpush.msra.mxu0 0.0
        %1197 = vmatpush.msra.mxu0 0.0
        %1198 = vmatpush.msra.mxu0 0.0
        %1199 = vmatpush.msra.mxu0 0.0
        %1200 = vmatpush.msra.mxu0 0.0
        %1201 = vmatpush.msra.mxu0 0.0
        %1202 = vmatpush.msra.mxu0 0.0
        %1203 = vmatpush.msra.mxu0 0.0
        %1204 = vmatpush.msra.mxu0 0.0
        %1205 = vmatpush.msra.mxu0 %v1154
        %1206 = vmatmul.f32.gmra.mxu0 %v1162
        %v1207 = vpop.f32.mrf.mxu0
        %v1208 = vadd.f32 0.0, %v1207
        %1209 = vmatmul.f32.gmra.mxu0 %v1165
        %v1210 = vpop.f32.mrf.mxu0
        %v1211 = vadd.f32 0.0, %v1210
        %1212 = vdwg.mxu0
        %v1213 = vld [vmem:[%s8] sm:$0xff]
        %v1214 = vld [vmem:[%s8 + $0x8] sm:$0xff]
        %v1215 = vld [vmem:[%s8 + $0x10] sm:$0xff]
        %v1217 = vsel %vm1160, %v1213, 0
        %v1220 = vsel %vm1160, %v1214, 0
        %v1223 = vsel %vm1160, %v1215, 0
        %1225 = vmatpush.msra.mxu0 0.0
        %1226 = vmatpush.msra.mxu0 0.0
        %1227 = vmatpush.msra.mxu0 0.0
        %1228 = vmatpush.msra.mxu0 0.0
        %1229 = vmatpush.msra.mxu0 0.0
        %1230 = vmatpush.msra.mxu0 0.0
        %1231 = vmatpush.msra.mxu0 0.0
        %1232 = vmatpush.msra.mxu0 0.0
        %1233 = vmatpush.msra.mxu0 0.0
        %1234 = vmatpush.msra.mxu0 0.0
        %1235 = vmatpush.msra.mxu0 0.0
        %1236 = vmatpush.msra.mxu0 0.0
        %1237 = vmatpush.msra.mxu0 0.0
        %1238 = vmatpush.msra.mxu0 0.0
        %1239 = vmatpush.msra.mxu0 0.0
        %1240 = vmatpush.msra.mxu0 %v1151
        %1241 = vmatmul.f32.gmra.mxu0 %v1217
        %v1242 = vpop.f32.mrf.mxu0
        %v1243 = vadd.f32 0.0, %v1242
        %1244 = vmatmul.f32.gmra.mxu0 %v1220
        %v1245 = vpop.f32.mrf.mxu0
        %v1246 = vadd.f32 0.0, %v1245
        %1247 = vmatmul.f32.gmra.mxu0 %v1223
        %v1248 = vpop.f32.mrf.mxu0
        %v1249 = vadd.f32 0.0, %v1248
        %1250 = vdwg.mxu0
        %1251 = vmatpush.msra.mxu0 0.0
        %1252 = vmatpush.msra.mxu0 0.0
        %1253 = vmatpush.msra.mxu0 0.0
        %1254 = vmatpush.msra.mxu0 0.0
        %1255 = vmatpush.msra.mxu0 0.0
        %1256 = vmatpush.msra.mxu0 0.0
        %1257 = vmatpush.msra.mxu0 0.0
        %1258 = vmatpush.msra.mxu0 0.0
        %1259 = vmatpush.msra.mxu0 0.0
        %1260 = vmatpush.msra.mxu0 0.0
        %1261 = vmatpush.msra.mxu0 0.0
        %1262 = vmatpush.msra.mxu0 0.0
        %1263 = vmatpush.msra.mxu0 0.0
        %1264 = vmatpush.msra.mxu0 0.0
        %1265 = vmatpush.msra.mxu0 0.0
        %1266 = vmatpush.msra.mxu0 %v1152
        %1267 = vmatmul.f32.gmra.mxu0 %v1217
        %v1268 = vpop.f32.mrf.mxu0
        %v1269 = vadd.f32 0.0, %v1268
        %1270 = vmatmul.f32.gmra.mxu0 %v1220
        %v1271 = vpop.f32.mrf.mxu0
        %v1272 = vadd.f32 0.0, %v1271
        %1273 = vmatmul.f32.gmra.mxu0 %v1223
        %v1274 = vpop.f32.mrf.mxu0
        %v1275 = vadd.f32 0.0, %v1274
        %1276 = vdwg.mxu0
        %v1277 = vadd.f32 %v1243, %v1185
        %v1278 = vadd.f32 %v1269, %v1208
        %1280 = vset.pattern.permute.xlu0 0
        %1281 = vperm.xlu0 %1280, %v1155
        %v1282 = vpop.permute.xlu0 %1281
        %v1284 = vadd.f32 %v1277, %v1282
        %v1285 = vadd.f32 %v1278, %v1282
        %v1286 = vadd.f32 %v1246, %v1188
        %v1287 = vadd.f32 %v1272, %v1211
        %1289 = vset.pattern.permute.xlu0 0
        %1290 = vperm.xlu0 %1289, %v1156
        %v1291 = vpop.permute.xlu0 %1290
        %v1293 = vadd.f32 %v1286, %v1291
        %v1294 = vadd.f32 %v1287, %v1291
        %1296 = vset.pattern.permute.xlu0 0
        %1297 = vperm.xlu0 %1296, %v1157
        %v1298 = vpop.permute.xlu0 %1297
        %v1300 = vadd.f32 %v1249, %v1298
        %v1301 = vadd.f32 %v1275, %v1298
        %v1302 = vxor.u32 %v1284, 2147483648
        %v1303 = vxor.u32 %v1285, 2147483648
        %v1304 = vmul.f32 %v1302, 1.442695
        %v1305 = vpow.pop %v1304
        %v1306 = vmul.f32 %v1303, 1.442695
        %v1307 = vpow.pop %v1306
        %v1308 = vadd.f32 %v1305, 1.0
        %v1309 = vadd.f32 %v1307, 1.0
        %v1310 = vrcp.pop %v1308
        %v1311 = vmul.f32 %v1308, %v1310
        %v1312 = vsub.f32 1.0, %v1311
        %v1313 = vmul.f32 %v1310, %v1312
        %v1314 = vadd.f32 %v1310, %v1313
        %vm1315 = vweird.f32 %v1308
        %vm1316 = vweird.f32 %v1310
        %vm1317 = vmor %vm1315, %vm1316
        %v1318 = vsel %vm1317, %v1310, %v1314
        %v1319 = vand.u32 2147483647, %v1308
        %vm1320 = vcmp.eq.f32.partialorder %v1319, 8.507059e+37
        %v1321 = vand.u32 %v1308, 2147483648
        %v1322 = vor.u32 1.1754944e-38, %v1321
        %v1323 = vsel %vm1320, %v1322, %v1318
        %v1324 = vmul.f32 1.0, %v1323
        %v1325 = vrcp.pop %v1309
        %v1326 = vmul.f32 %v1309, %v1325
        %v1327 = vsub.f32 1.0, %v1326
        %v1328 = vmul.f32 %v1325, %v1327
        %v1329 = vadd.f32 %v1325, %v1328
        %vm1330 = vweird.f32 %v1309
        %vm1331 = vweird.f32 %v1325
        %vm1332 = vmor %vm1330, %vm1331
        %v1333 = vsel %vm1332, %v1325, %v1329
        %v1334 = vand.u32 2147483647, %v1309
        %vm1335 = vcmp.eq.f32.partialorder %v1334, 8.507059e+37
        %v1336 = vand.u32 %v1309, 2147483648
        %v1337 = vor.u32 1.1754944e-38, %v1336
        %v1338 = vsel %vm1335, %v1337, %v1333
        %v1339 = vmul.f32 1.0, %v1338
        %v1340 = vxor.u32 %v1293, 2147483648
        %v1341 = vxor.u32 %v1294, 2147483648
        %v1342 = vmul.f32 %v1340, 1.442695
        %v1343 = vpow.pop %v1342
        %v1344 = vmul.f32 %v1341, 1.442695
        %v1345 = vpow.pop %v1344
        %v1346 = vadd.f32 %v1343, 1.0
        %v1347 = vadd.f32 %v1345, 1.0
        %v1348 = vrcp.pop %v1346
        %v1349 = vmul.f32 %v1346, %v1348
        %v1350 = vsub.f32 1.0, %v1349
        %v1351 = vmul.f32 %v1348, %v1350
        %v1352 = vadd.f32 %v1348, %v1351
        %vm1353 = vweird.f32 %v1346
        %vm1354 = vweird.f32 %v1348
        %vm1355 = vmor %vm1353, %vm1354
        %v1356 = vsel %vm1355, %v1348, %v1352
        %v1357 = vand.u32 2147483647, %v1346
        %vm1358 = vcmp.eq.f32.partialorder %v1357, 8.507059e+37
        %v1359 = vand.u32 %v1346, 2147483648
        %v1360 = vor.u32 1.1754944e-38, %v1359
        %v1361 = vsel %vm1358, %v1360, %v1356
        %v1362 = vmul.f32 1.0, %v1361
        %v1363 = vrcp.pop %v1347
        %v1364 = vmul.f32 %v1347, %v1363
        %v1365 = vsub.f32 1.0, %v1364
        %v1366 = vmul.f32 %v1363, %v1365
        %v1367 = vadd.f32 %v1363, %v1366
        %vm1368 = vweird.f32 %v1347
        %vm1369 = vweird.f32 %v1363
        %vm1370 = vmor %vm1368, %vm1369
        %v1371 = vsel %vm1370, %v1363, %v1367
        %v1372 = vand.u32 2147483647, %v1347
        %vm1373 = vcmp.eq.f32.partialorder %v1372, 8.507059e+37
        %v1374 = vand.u32 %v1347, 2147483648
        %v1375 = vor.u32 1.1754944e-38, %v1374
        %v1376 = vsel %vm1373, %v1375, %v1371
        %v1377 = vmul.f32 1.0, %v1376
        %v1378 = vld [vmem:[%s10] sm:$0xff]
        %v1379 = vmul.f32 %v1362, %v1153
        %v1380 = vmul.f32 %v1377, %v1154
        %v1382 = vsel %vm1160, %v1378, 0
        %1384 = vmatpush.msra.mxu0 0.0
        %1385 = vmatpush.msra.mxu0 0.0
        %1386 = vmatpush.msra.mxu0 0.0
        %1387 = vmatpush.msra.mxu0 0.0
        %1388 = vmatpush.msra.mxu0 0.0
        %1389 = vmatpush.msra.mxu0 0.0
        %1390 = vmatpush.msra.mxu0 0.0
        %1391 = vmatpush.msra.mxu0 0.0
        %1392 = vmatpush.msra.mxu0 0.0
        %1393 = vmatpush.msra.mxu0 0.0
        %1394 = vmatpush.msra.mxu0 0.0
        %1395 = vmatpush.msra.mxu0 0.0
        %1396 = vmatpush.msra.mxu0 0.0
        %1397 = vmatpush.msra.mxu0 0.0
        %1398 = vmatpush.msra.mxu0 0.0
        %1399 = vmatpush.msra.mxu0 %v1379
        %1400 = vmatmul.f32.gmra.mxu0 %v1382
        %v1401 = vpop.f32.mrf.mxu0
        %v1402 = vadd.f32 0.0, %v1401
        %1403 = vdwg.mxu0
        %1404 = vmatpush.msra.mxu0 0.0
        %1405 = vmatpush.msra.mxu0 0.0
        %1406 = vmatpush.msra.mxu0 0.0
        %1407 = vmatpush.msra.mxu0 0.0
        %1408 = vmatpush.msra.mxu0 0.0
        %1409 = vmatpush.msra.mxu0 0.0
        %1410 = vmatpush.msra.mxu0 0.0
        %1411 = vmatpush.msra.mxu0 0.0
        %1412 = vmatpush.msra.mxu0 0.0
        %1413 = vmatpush.msra.mxu0 0.0
        %1414 = vmatpush.msra.mxu0 0.0
        %1415 = vmatpush.msra.mxu0 0.0
        %1416 = vmatpush.msra.mxu0 0.0
        %1417 = vmatpush.msra.mxu0 0.0
        %1418 = vmatpush.msra.mxu0 0.0
        %1419 = vmatpush.msra.mxu0 %v1380
        %1420 = vmatmul.f32.gmra.mxu0 %v1382
        %v1421 = vpop.f32.mrf.mxu0
        %v1422 = vadd.f32 0.0, %v1421
        %1423 = vdwg.mxu0
        %v1424 = vadd.f32 %v1300, %v1402
        %v1425 = vadd.f32 %v1301, %v1422
        %v1426 = vtanh.pop %v1424
        %v1427 = vtanh.pop %v1425
        %v1428 = vsub.f32 1.0, %v1324
        %v1429 = vsub.f32 1.0, %v1339
        %v1430 = vmul.f32 %v1428, %v1426
        %v1431 = vmul.f32 %v1429, %v1427
        %v1432 = vmul.f32 %v1324, %v1153
        %v1433 = vmul.f32 %v1339, %v1154
        %v1434 = vadd.f32 %v1430, %v1432
        %v1435 = vadd.f32 %v1431, %v1433
        %1436 = vst [vmem:[#allocation3] sm:$0xff] %v1434
        %1437 = vst [vmem:[#allocation3 + $0x8] sm:$0xff] %v1435
        %v1438 = vld [vmem:[%s12] sm:$0xff]
        %v1439 = vld [vmem:[%s13] sm:$0xff]
        %1441 = vset.pattern.permute.xlu0 0
        %1442 = vperm.xlu0 %1441, %v1439
        %v1443 = vpop.permute.xlu0 %1442
        %v1446 = vsel %vm1160, %v1438, 0
        %1448 = vmatpush.msra.mxu0 0.0
        %1449 = vmatpush.msra.mxu0 0.0
        %1450 = vmatpush.msra.mxu0 0.0
        %1451 = vmatpush.msra.mxu0 0.0
        %1452 = vmatpush.msra.mxu0 0.0
        %1453 = vmatpush.msra.mxu0 0.0
        %1454 = vmatpush.msra.mxu0 0.0
        %1455 = vmatpush.msra.mxu0 0.0
        %1456 = vmatpush.msra.mxu0 0.0
        %1457 = vmatpush.msra.mxu0 0.0
        %1458 = vmatpush.msra.mxu0 0.0
        %1459 = vmatpush.msra.mxu0 0.0
        %1460 = vmatpush.msra.mxu0 0.0
        %1461 = vmatpush.msra.mxu0 0.0
        %1462 = vmatpush.msra.mxu0 0.0
        %1463 = vmatpush.msra.mxu0 %v1434
        %1464 = vmatmul.f32.gmra.mxu0 %v1446
        %v1465 = vpop.f32.mrf.mxu0
        %v1466 = vadd.f32 %v1443, %v1465
        %1467 = vdwg.mxu0
        %1468 = vmatpush.msra.mxu0 0.0
        %1469 = vmatpush.msra.mxu0 0.0
        %1470 = vmatpush.msra.mxu0 0.0
        %1471 = vmatpush.msra.mxu0 0.0
        %1472 = vmatpush.msra.mxu0 0.0
        %1473 = vmatpush.msra.mxu0 0.0
        %1474 = vmatpush.msra.mxu0 0.0
        %1475 = vmatpush.msra.mxu0 0.0
        %1476 = vmatpush.msra.mxu0 0.0
        %1477 = vmatpush.msra.mxu0 0.0
        %1478 = vmatpush.msra.mxu0 0.0
        %1479 = vmatpush.msra.mxu0 0.0
        %1480 = vmatpush.msra.mxu0 0.0
        %1481 = vmatpush.msra.mxu0 0.0
        %1482 = vmatpush.msra.mxu0 0.0
        %1483 = vmatpush.msra.mxu0 %v1435
        %1484 = vmatmul.f32.gmra.mxu0 %v1446
        %v1485 = vpop.f32.mrf.mxu0
        %v1486 = vadd.f32 %v1443, %v1485
        %1487 = vdwg.mxu0
        %vm1488 = vcmp.ge.f32.partialorder %v1466, 0.0
        %vm1489 = vcmp.ge.f32.partialorder %v1486, 0.0
        %v1490 = vmul.f32 %v1466, 0.2
        %v1491 = vmul.f32 %v1486, 0.2
        %v1492 = vsel %vm1488, %v1466, %v1490
        %v1493 = vsel %vm1489, %v1486, %v1491
        %v1494 = vld [vmem:[#allocation4] sm:$0xff]
        %v1495 = vld [vmem:[#allocation4 + $0x8] sm:$0xff]
        %v1496 = vld [vmem:[%s17] sm:$0xff]
        %v1497 = vld [vmem:[%s17 + $0x8] sm:$0xff]
        %v1498 = vld [vmem:[%s17 + $0x10] sm:$0xff]
        %v1499 = vld [vmem:[%s15] sm:$0xff]
        %v1500 = vld [vmem:[%s15 + $0x8] sm:$0xff]
        %v1502 = vsel %vm1160, %v1499, 0
        %v1505 = vsel %vm1160, %v1500, 0
        %1507 = vmatpush.msra.mxu0 0.0
        %1508 = vmatpush.msra.mxu0 0.0
        %1509 = vmatpush.msra.mxu0 0.0
        %1510 = vmatpush.msra.mxu0 0.0
        %1511 = vmatpush.msra.mxu0 0.0
        %1512 = vmatpush.msra.mxu0 0.0
        %1513 = vmatpush.msra.mxu0 0.0
        %1514 = vmatpush.msra.mxu0 0.0
        %1515 = vmatpush.msra.mxu0 0.0
        %1516 = vmatpush.msra.mxu0 0.0
        %1517 = vmatpush.msra.mxu0 0.0
        %1518 = vmatpush.msra.mxu0 0.0
        %1519 = vmatpush.msra.mxu0 0.0
        %1520 = vmatpush.msra.mxu0 0.0
        %1521 = vmatpush.msra.mxu0 0.0
        %1522 = vmatpush.msra.mxu0 %v1494
        %1523 = vmatmul.f32.gmra.mxu0 %v1502
        %v1524 = vpop.f32.mrf.mxu0
        %v1525 = vadd.f32 0.0, %v1524
        %1526 = vmatmul.f32.gmra.mxu0 %v1505
        %v1527 = vpop.f32.mrf.mxu0
        %v1528 = vadd.f32 0.0, %v1527
        %1529 = vdwg.mxu0
        %1530 = vmatpush.msra.mxu0 0.0
        %1531 = vmatpush.msra.mxu0 0.0
        %1532 = vmatpush.msra.mxu0 0.0
        %1533 = vmatpush.msra.mxu0 0.0
        %1534 = vmatpush.msra.mxu0 0.0
        %1535 = vmatpush.msra.mxu0 0.0
        %1536 = vmatpush.msra.mxu0 0.0
        %1537 = vmatpush.msra.mxu0 0.0
        %1538 = vmatpush.msra.mxu0 0.0
        %1539 = vmatpush.msra.mxu0 0.0
        %1540 = vmatpush.msra.mxu0 0.0
        %1541 = vmatpush.msra.mxu0 0.0
        %1542 = vmatpush.msra.mxu0 0.0
        %1543 = vmatpush.msra.mxu0 0.0
        %1544 = vmatpush.msra.mxu0 0.0
        %1545 = vmatpush.msra.mxu0 %v1495
        %1546 = vmatmul.f32.gmra.mxu0 %v1502
        %v1547 = vpop.f32.mrf.mxu0
        %v1548 = vadd.f32 0.0, %v1547
        %1549 = vmatmul.f32.gmra.mxu0 %v1505
        %v1550 = vpop.f32.mrf.mxu0
        %v1551 = vadd.f32 0.0, %v1550
        %1552 = vdwg.mxu0
        %v1553 = vld [vmem:[%s14] sm:$0xff]
        %v1554 = vld [vmem:[%s14 + $0x8] sm:$0xff]
        %v1555 = vld [vmem:[%s14 + $0x10] sm:$0xff]
        %v1557 = vsel %vm1160, %v1553, 0
        %v1560 = vsel %vm1160, %v1554, 0
        %v1563 = vsel %vm1160, %v1555, 0
        %1565 = vmatpush.msra.mxu0 0.0
        %1566 = vmatpush.msra.mxu0 0.0
        %1567 = vmatpush.msra.mxu0 0.0
        %1568 = vmatpush.msra.mxu0 0.0
        %1569 = vmatpush.msra.mxu0 0.0
        %1570 = vmatpush.msra.mxu0 0.0
        %1571 = vmatpush.msra.mxu0 0.0
        %1572 = vmatpush.msra.mxu0 0.0
        %1573 = vmatpush.msra.mxu0 0.0
        %1574 = vmatpush.msra.mxu0 0.0
        %1575 = vmatpush.msra.mxu0 0.0
        %1576 = vmatpush.msra.mxu0 0.0
        %1577 = vmatpush.msra.mxu0 0.0
        %1578 = vmatpush.msra.mxu0 0.0
        %1579 = vmatpush.msra.mxu0 0.0
        %1580 = vmatpush.msra.mxu0 %v1492
        %1581 = vmatmul.f32.gmra.mxu0 %v1557
        %v1582 = vpop.f32.mrf.mxu0
        %v1583 = vadd.f32 0.0, %v1582
        %1584 = vmatmul.f32.gmra.mxu0 %v1560
        %v1585 = vpop.f32.mrf.mxu0
        %v1586 = vadd.f32 0.0, %v1585
        %1587 = vmatmul.f32.gmra.mxu0 %v1563
        %v1588 = vpop.f32.mrf.mxu0
        %v1589 = vadd.f32 0.0, %v1588
        %1590 = vdwg.mxu0
        %1591 = vmatpush.msra.mxu0 0.0
        %1592 = vmatpush.msra.mxu0 0.0
        %1593 = vmatpush.msra.mxu0 0.0
        %1594 = vmatpush.msra.mxu0 0.0
        %1595 = vmatpush.msra.mxu0 0.0
        %1596 = vmatpush.msra.mxu0 0.0
        %1597 = vmatpush.msra.mxu0 0.0
        %1598 = vmatpush.msra.mxu0 0.0
        %1599 = vmatpush.msra.mxu0 0.0
        %1600 = vmatpush.msra.mxu0 0.0
        %1601 = vmatpush.msra.mxu0 0.0
        %1602 = vmatpush.msra.mxu0 0.0
        %1603 = vmatpush.msra.mxu0 0.0
        %1604 = vmatpush.msra.mxu0 0.0
        %1605 = vmatpush.msra.mxu0 0.0
        %1606 = vmatpush.msra.mxu0 %v1493
        %1607 = vmatmul.f32.gmra.mxu0 %v1557
        %v1608 = vpop.f32.mrf.mxu0
        %v1609 = vadd.f32 0.0, %v1608
        %1610 = vmatmul.f32.gmra.mxu0 %v1560
        %v1611 = vpop.f32.mrf.mxu0
        %v1612 = vadd.f32 0.0, %v1611
        %1613 = vmatmul.f32.gmra.mxu0 %v1563
        %v1614 = vpop.f32.mrf.mxu0
        %v1615 = vadd.f32 0.0, %v1614
        %1616 = vdwg.mxu0
        %v1617 = vadd.f32 %v1583, %v1525
        %v1618 = vadd.f32 %v1609, %v1548
        %1620 = vset.pattern.permute.xlu0 0
        %1621 = vperm.xlu0 %1620, %v1496
        %v1622 = vpop.permute.xlu0 %1621
        %v1624 = vadd.f32 %v1617, %v1622
        %v1625 = vadd.f32 %v1618, %v1622
        %v1626 = vadd.f32 %v1586, %v1528
        %v1627 = vadd.f32 %v1612, %v1551
        %1629 = vset.pattern.permute.xlu0 0
        %1630 = vperm.xlu0 %1629, %v1497
        %v1631 = vpop.permute.xlu0 %1630
        %v1633 = vadd.f32 %v1626, %v1631
        %v1634 = vadd.f32 %v1627, %v1631
        %1636 = vset.pattern.permute.xlu0 0
        %1637 = vperm.xlu0 %1636, %v1498
        %v1638 = vpop.permute.xlu0 %1637
        %v1640 = vadd.f32 %v1589, %v1638
        %v1641 = vadd.f32 %v1615, %v1638
        %v1642 = vxor.u32 %v1624, 2147483648
        %v1643 = vxor.u32 %v1625, 2147483648
        %v1644 = vmul.f32 %v1642, 1.442695
        %v1645 = vpow.pop %v1644
        %v1646 = vmul.f32 %v1643, 1.442695
        %v1647 = vpow.pop %v1646
        %v1648 = vadd.f32 %v1645, 1.0
        %v1649 = vadd.f32 %v1647, 1.0
        %v1650 = vrcp.pop %v1648
        %v1651 = vmul.f32 %v1648, %v1650
        %v1652 = vsub.f32 1.0, %v1651
        %v1653 = vmul.f32 %v1650, %v1652
        %v1654 = vadd.f32 %v1650, %v1653
        %vm1655 = vweird.f32 %v1648
        %vm1656 = vweird.f32 %v1650
        %vm1657 = vmor %vm1655, %vm1656
        %v1658 = vsel %vm1657, %v1650, %v1654
        %v1659 = vand.u32 2147483647, %v1648
        %vm1660 = vcmp.eq.f32.partialorder %v1659, 8.507059e+37
        %v1661 = vand.u32 %v1648, 2147483648
        %v1662 = vor.u32 1.1754944e-38, %v1661
        %v1663 = vsel %vm1660, %v1662, %v1658
        %v1664 = vmul.f32 1.0, %v1663
        %v1665 = vrcp.pop %v1649
        %v1666 = vmul.f32 %v1649, %v1665
        %v1667 = vsub.f32 1.0, %v1666
        %v1668 = vmul.f32 %v1665, %v1667
        %v1669 = vadd.f32 %v1665, %v1668
        %vm1670 = vweird.f32 %v1649
        %vm1671 = vweird.f32 %v1665
        %vm1672 = vmor %vm1670, %vm1671
        %v1673 = vsel %vm1672, %v1665, %v1669
        %v1674 = vand.u32 2147483647, %v1649
        %vm1675 = vcmp.eq.f32.partialorder %v1674, 8.507059e+37
        %v1676 = vand.u32 %v1649, 2147483648
        %v1677 = vor.u32 1.1754944e-38, %v1676
        %v1678 = vsel %vm1675, %v1677, %v1673
        %v1679 = vmul.f32 1.0, %v1678
        %v1680 = vxor.u32 %v1633, 2147483648
        %v1681 = vxor.u32 %v1634, 2147483648
        %v1682 = vmul.f32 %v1680, 1.442695
        %v1683 = vpow.pop %v1682
        %v1684 = vmul.f32 %v1681, 1.442695
        %v1685 = vpow.pop %v1684
        %v1686 = vadd.f32 %v1683, 1.0
        %v1687 = vadd.f32 %v1685, 1.0
        %v1688 = vrcp.pop %v1686
        %v1689 = vmul.f32 %v1686, %v1688
        %v1690 = vsub.f32 1.0, %v1689
        %v1691 = vmul.f32 %v1688, %v1690
        %v1692 = vadd.f32 %v1688, %v1691
        %vm1693 = vweird.f32 %v1686
        %vm1694 = vweird.f32 %v1688
        %vm1695 = vmor %vm1693, %vm1694
        %v1696 = vsel %vm1695, %v1688, %v1692
        %v1697 = vand.u32 2147483647, %v1686
        %vm1698 = vcmp.eq.f32.partialorder %v1697, 8.507059e+37
        %v1699 = vand.u32 %v1686, 2147483648
        %v1700 = vor.u32 1.1754944e-38, %v1699
        %v1701 = vsel %vm1698, %v1700, %v1696
        %v1702 = vmul.f32 1.0, %v1701
        %v1703 = vrcp.pop %v1687
        %v1704 = vmul.f32 %v1687, %v1703
        %v1705 = vsub.f32 1.0, %v1704
        %v1706 = vmul.f32 %v1703, %v1705
        %v1707 = vadd.f32 %v1703, %v1706
        %vm1708 = vweird.f32 %v1687
        %vm1709 = vweird.f32 %v1703
        %vm1710 = vmor %vm1708, %vm1709
        %v1711 = vsel %vm1710, %v1703, %v1707
        %v1712 = vand.u32 2147483647, %v1687
        %vm1713 = vcmp.eq.f32.partialorder %v1712, 8.507059e+37
        %v1714 = vand.u32 %v1687, 2147483648
        %v1715 = vor.u32 1.1754944e-38, %v1714
        %v1716 = vsel %vm1713, %v1715, %v1711
        %v1717 = vmul.f32 1.0, %v1716
        %v1718 = vld [vmem:[%s16] sm:$0xff]
        %v1719 = vmul.f32 %v1702, %v1494
        %v1720 = vmul.f32 %v1717, %v1495
        %v1722 = vsel %vm1160, %v1718, 0
        %1724 = vmatpush.msra.mxu0 0.0
        %1725 = vmatpush.msra.mxu0 0.0
        %1726 = vmatpush.msra.mxu0 0.0
        %1727 = vmatpush.msra.mxu0 0.0
        %1728 = vmatpush.msra.mxu0 0.0
        %1729 = vmatpush.msra.mxu0 0.0
        %1730 = vmatpush.msra.mxu0 0.0
        %1731 = vmatpush.msra.mxu0 0.0
        %1732 = vmatpush.msra.mxu0 0.0
        %1733 = vmatpush.msra.mxu0 0.0
        %1734 = vmatpush.msra.mxu0 0.0
        %1735 = vmatpush.msra.mxu0 0.0
        %1736 = vmatpush.msra.mxu0 0.0
        %1737 = vmatpush.msra.mxu0 0.0
        %1738 = vmatpush.msra.mxu0 0.0
        %1739 = vmatpush.msra.mxu0 %v1719
        %1740 = vmatmul.f32.gmra.mxu0 %v1722
        %v1741 = vpop.f32.mrf.mxu0
        %v1742 = vadd.f32 0.0, %v1741
        %1743 = vdwg.mxu0
        %1744 = vmatpush.msra.mxu0 0.0
        %1745 = vmatpush.msra.mxu0 0.0
        %1746 = vmatpush.msra.mxu0 0.0
        %1747 = vmatpush.msra.mxu0 0.0
        %1748 = vmatpush.msra.mxu0 0.0
        %1749 = vmatpush.msra.mxu0 0.0
        %1750 = vmatpush.msra.mxu0 0.0
        %1751 = vmatpush.msra.mxu0 0.0
        %1752 = vmatpush.msra.mxu0 0.0
        %1753 = vmatpush.msra.mxu0 0.0
        %1754 = vmatpush.msra.mxu0 0.0
        %1755 = vmatpush.msra.mxu0 0.0
        %1756 = vmatpush.msra.mxu0 0.0
        %1757 = vmatpush.msra.mxu0 0.0
        %1758 = vmatpush.msra.mxu0 0.0
        %1759 = vmatpush.msra.mxu0 %v1720
        %1760 = vmatmul.f32.gmra.mxu0 %v1722
        %v1761 = vpop.f32.mrf.mxu0
        %v1762 = vadd.f32 0.0, %v1761
        %1763 = vdwg.mxu0
        %v1764 = vadd.f32 %v1640, %v1742
        %v1765 = vadd.f32 %v1641, %v1762
        %v1766 = vtanh.pop %v1764
        %v1767 = vtanh.pop %v1765
        %v1768 = vsub.f32 1.0, %v1664
        %v1769 = vsub.f32 1.0, %v1679
        %v1770 = vmul.f32 %v1768, %v1766
        %v1771 = vmul.f32 %v1769, %v1767
        %v1772 = vmul.f32 %v1664, %v1494
        %v1773 = vmul.f32 %v1679, %v1495
        %v1774 = vadd.f32 %v1770, %v1772
        %v1775 = vadd.f32 %v1771, %v1773
        %1776 = vst [vmem:[#allocation4] sm:$0xff] %v1774
        %1777 = vst [vmem:[#allocation4 + $0x8] sm:$0xff] %v1775
        %v1778 = vld [vmem:[%s18] sm:$0x1]
        %v1779 = vld [vmem:[#allocation5] sm:$0x1]
        %1781 = vset.pattern.permute.xlu0 0
        %1782 = vperm.xlu0 %1781, %v1779
        %v1783 = vpop.permute.xlu0 %1782
        %v1785 = vperm.slane %v1783, 0
        %v1787 = vsel %vm1160, %v1778, 0
        %1789 = vmatpush.msra.mxu0 0.0
        %1790 = vmatpush.msra.mxu0 0.0
        %1791 = vmatpush.msra.mxu0 0.0
        %1792 = vmatpush.msra.mxu0 0.0
        %1793 = vmatpush.msra.mxu0 0.0
        %1794 = vmatpush.msra.mxu0 0.0
        %1795 = vmatpush.msra.mxu0 0.0
        %1796 = vmatpush.msra.mxu0 0.0
        %1797 = vmatpush.msra.mxu0 0.0
        %1798 = vmatpush.msra.mxu0 0.0
        %1799 = vmatpush.msra.mxu0 0.0
        %1800 = vmatpush.msra.mxu0 0.0
        %1801 = vmatpush.msra.mxu0 0.0
        %1802 = vmatpush.msra.mxu0 0.0
        %1803 = vmatpush.msra.mxu0 0.0
        %1804 = vmatpush.msra.mxu0 %v1774
        %1805 = vmatmul.f32.gmra.mxu0 %v1787
        %v1806 = vpop.f32.mrf.mxu0
        %v1807 = vadd.f32 %v1785, %v1806
        %1808 = vdwg.mxu0
        %1809 = vmatpush.msra.mxu0 0.0
        %1810 = vmatpush.msra.mxu0 0.0
        %1811 = vmatpush.msra.mxu0 0.0
        %1812 = vmatpush.msra.mxu0 0.0
        %1813 = vmatpush.msra.mxu0 0.0
        %1814 = vmatpush.msra.mxu0 0.0
        %1815 = vmatpush.msra.mxu0 0.0
        %1816 = vmatpush.msra.mxu0 0.0
        %1817 = vmatpush.msra.mxu0 0.0
        %1818 = vmatpush.msra.mxu0 0.0
        %1819 = vmatpush.msra.mxu0 0.0
        %1820 = vmatpush.msra.mxu0 0.0
        %1821 = vmatpush.msra.mxu0 0.0
        %1822 = vmatpush.msra.mxu0 0.0
        %1823 = vmatpush.msra.mxu0 0.0
        %1824 = vmatpush.msra.mxu0 %v1775
        %1825 = vmatmul.f32.gmra.mxu0 %v1787
        %v1826 = vpop.f32.mrf.mxu0
        %v1827 = vadd.f32 %v1785, %v1826
        %1828 = vdwg.mxu0
        %v1831 = vrot.slane %v1827, 7
        %vm1832 = vcmask 1040384
        %v1833 = vsel %vm1832, %v1807, %v1831
        %v1835 = vlaneseq
        %vm1836 = vcmp.ge.s32.totalorder %v1835, 0
        %vm1837 = vcmp.lt.s32.totalorder %v1835, 256
        %vm1838 = vmand %vm1836, %vm1837
        %1839 = vst.msk [vmem:[%s701] sm:$0x3] %vm1838, %v1833
        %s1840 = sand.u32 %s493, 1
        %s1841 = scalar_lea.sflag [#allocation8], %s1840
        %s1842 = sand.u32 %s493, 1
        %s1843 = smul.addr %s1842, 2
        %s1844 = scalar_lea.vmem [#allocation7], %s1843
        // Predicated region
        $region128: #{tpu_custom_call.1} parent=118 // pred_check
          %p1845 = pneg %p503
        $region129: #{tpu_custom_call.1} parent=118 // pred_check_branch
          %1847 = sbr.rel (%p1845) target = $region131
        $region130: #{tpu_custom_call.1} parent=118 // pred_region
          %s1848 = smul.u32 2, %s40
          %1850 = vsyncadd %s1841, 0
          %s1851 = smul.addr %s41, 4
          %s1852 = sadd.s32 %s1848, %s1851
          %s1853 = scalar_lea.hbm %s20, %s1852
          %s1855 = sshll.u32 %s1844, 4
          %s1856 = int_to_ptr.vmem [resolvable:$true] %s1855
          %s1857 = sshll.u32 %s1853, 4
          %s1858 = int_to_ptr.hbm [resolvable:$true] %s1857
          %1860 = dma.vmem_to_hbm [thread:$0]  %s1856, 32, %s1858, %s1841
        $region131: #{tpu_custom_call.1} parent=118 // pred_fallthru
          _
      $region119: #{tpu_custom_call.1} parent=5 // pred_fallthru
        _
      %p1861 = scmp.le.s32.totalorder 2, %s31
      // Predicated region
      $region132: #{tpu_custom_call.1} parent=5 // pred_check
        %p1862 = pneg %p1861
      $region133: #{tpu_custom_call.1} parent=5 // pred_check_branch
        %1864 = sbr.rel (%p1862) target = $region135
      $region134: #{tpu_custom_call.1} parent=5 // pred_region
        %s1865 = ssub.s32 %s31, 2
        // Predicated region
        $region136: #{tpu_custom_call.1} parent=134 // pred_check
          %p1866 = pneg %p509
        $region137: #{tpu_custom_call.1} parent=134 // pred_check_branch
          %1868 = sbr.rel (%p1866) target = $region139
        $region138: #{tpu_custom_call.1} parent=134 // pred_region
          %s1869 = sand.u32 %s494, 1
          %s1870 = scalar_lea.sflag [#allocation8], %s1869
          %s1871 = sand.u32 %s494, 1
          %s1872 = smul.addr %s1871, 2
          %s1873 = scalar_lea.vmem [#allocation7], %s1872
          %1875 = dma.done %s1870, 32
        $region139: #{tpu_custom_call.1} parent=134 // pred_fallthru
          _
      $region135: #{tpu_custom_call.1} parent=5 // pred_fallthru
        _
    $region6: #{tpu_custom_call.1} parent=1 // loop_footer
      %s35 = sadd.s32 1, %s31
    $region7: #{tpu_custom_call.1} parent=1 // loop_footer_branch
      %30 = sbr.rel target = $region3
    $region8: #{tpu_custom_call.1} parent=1 // loop_exit
      _
    %1876 = vsyncpa [#allocation8], 1
    %s1877 = scalar_lea.sflag [#allocation8], 1
    %1878 = vsyncpa %s1877, 1

</llo_original>
